<compile_context>
chip_gen: v7x
topology: tpu7x:2x2x1
jax: 0.10.0
libtpu: 0.0.40
codegen_flags: <defaults>
</compile_context>

<pallas_src>
import functools

import jax
import jax.numpy as jnp
from jax.experimental import pallas as pl
from jax.experimental.pallas import tpu as pltpu


def _bilinear_matrix(out_size: int, in_size: int) -> jnp.ndarray:
    """Row-stochastic (out_size, in_size) bilinear interpolation matrix.

    Matches PyTorch/kornia bilinear with align_corners=False, antialias=False.
    """
    i = jnp.arange(out_size, dtype=jnp.float32)
    scale = in_size / out_size
    src = (i + 0.5) * scale - 0.5
    src = jnp.maximum(src, 0.0)                       # PyTorch clamps negative src to 0
    i0 = jnp.floor(src).astype(jnp.int32)
    i0 = jnp.minimum(i0, in_size - 1)
    i1 = jnp.minimum(i0 + 1, in_size - 1)
    w1 = src - i0.astype(jnp.float32)
    w0 = 1.0 - w1
    cols = jnp.arange(in_size, dtype=jnp.int32)
    onehot0 = (cols[None, :] == i0[:, None]).astype(jnp.float32)
    onehot1 = (cols[None, :] == i1[:, None]).astype(jnp.float32)
    return w0[:, None] * onehot0 + w1[:, None] * onehot1


def _vmem_capacity_bytes() -> int:
    """Per-generation VMEM capacity, with a conservative fallback (v7x = 64 MiB)."""
    try:
        info = pltpu.get_tpu_info()
        cap = getattr(info, "vmem_capacity_bytes", None)
        if cap:
            return int(cap)
    except Exception:
        pass
    return 64 * 1024 * 1024


def _rs_kernel(a_ref, bt_ref, x_ref, o_ref):
    # a_ref : (64, H)   combined height-resize matrix A = Wh2 @ Wh1 (weights-on-left)
    # bt_ref: (W, 64)   combined width-resize matrix, pre-transposed (Ww2 @ Ww1).T
    # x_ref : (TB, H, W) batch of image planes (natural H-sublane / W-lane layout)
    # o_ref : (TB, 64, 64)
    tb, h, w = x_ref.shape
    o_hw = a_ref.shape[0]

    x = x_ref[...].astype(jnp.float32)

    # Stage 1 — width resize as a single flat big-M GEMM (no data transpose):
    #   t[(b,h), o] = sum_w x[b,h,w] * Bt[w,o]
    t = jnp.dot(x.reshape(tb * h, w), bt_ref[...],
                preferred_element_type=jnp.float32)              # (TB*H, 64)
    t3 = t.reshape(tb, h, o_hw)                                  # merges/splits leading dims: free

    # Stage 2 — height resize as a batched, weights-on-left matmul. Both operands
    # stay in natural (sublane, lane) layout so no XLU transpose is generated;
    # the result lands directly in (plane, h_out, w_out) order.
    #   z[b,o,d] = sum_h A[o,h] * t[b,h,d]
    a_b = jnp.broadcast_to(a_ref[...][None, :, :], (tb, o_hw, h))
    z = jnp.einsum("boh,bhd->bod", a_b, t3,
                   preferred_element_type=jnp.float32)           # (TB, 64, 64)

    o_ref[...] = z.astype(o_ref.dtype)


@functools.partial(jax.jit, static_argnames=("size",))
def rs_forward(image_and_cover: jnp.ndarray, size: int) -> jnp.ndarray:
    """Forward pass of RS: resize NCHW image to (size,size) then to (64,64)."""
    image = image_and_cover
    n, c, h, w = image.shape
    out_hw = 64

    # Fold the two bilinear stages (exact for linear resampling). Plain-JAX glue.
    wh1 = _bilinear_matrix(size, h)            # (size, H)
    ww1 = _bilinear_matrix(size, w)            # (size, W)
    wh2 = _bilinear_matrix(out_hw, size)       # (64, size)
    ww2 = _bilinear_matrix(out_hw, size)       # (64, size)
    a = wh2 @ wh1                              # (64, H)  weights-on-left stage
    bt = (ww2 @ ww1).T                         # (W, 64)  data @ Bt stage

    # --- Plane-batch (TB) selection, gated on this generation's VMEM. ---------
    nc = n * c
    cap = _vmem_capacity_bytes()
    budget = min(cap // 2, 64 << 20)           # block + temp budget; leave headroom
    weight_bytes = 2 * 4 * (w * out_hw + out_hw * h)          # double-buffered weights
    # per-plane VMEM: x block (x2), o block (x2), broadcast A, t temp, z temp (f32)
    per_plane = 4 * (2 * h * w + 3 * out_hw * out_hw + 2 * out_hw * h)
    tb = max(8, int((budget - weight_bytes) // per_plane) // 8 * 8)
    tb = min(tb, 128)                          # keep >1 grid step for v7x on big inputs
    nc8 = ((nc + 7) // 8) * 8
    tb = min(tb, nc8)
    n_steps = -(-nc // tb)
    nc_pad = n_steps * tb

    x_flat = image.reshape(nc, h, w)
    if nc_pad != nc:
        x_flat = jnp.pad(x_flat, ((0, nc_pad - nc), (0, 0), (0, 0)))

    vmem_need = tb * per_plane + weight_bytes + (8 << 20)
    vmem_limit = int(min(max(vmem_need, 32 << 20), max(cap - (4 << 20), 32 << 20)))

    out_flat = pl.pallas_call(
        _rs_kernel,
        out_shape=jax.ShapeDtypeStruct((nc_pad, out_hw, out_hw), image.dtype),
        grid_spec=pltpu.PrefetchScalarGridSpec(
            num_scalar_prefetch=0,
            grid=(n_steps,),
            in_specs=[
                pl.BlockSpec((out_hw, h), lambda b: (0, 0)),      # A  (constant block)
                pl.BlockSpec((w, out_hw), lambda b: (0, 0)),      # Bt (constant block)
                pl.BlockSpec((tb, h, w), lambda b: (b, 0, 0)),    # x planes
            ],
            out_specs=pl.BlockSpec((tb, out_hw, out_hw), lambda b: (b, 0, 0)),
        ),
        compiler_params=pltpu.CompilerParams(
            dimension_semantics=("parallel",),
            vmem_limit_bytes=vmem_limit,
        ),
    )(a, bt, x_flat)

    return out_flat[:nc].reshape(n, c, out_hw, out_hw)


def _rs_reference(image: jnp.ndarray, size: int) -> jnp.ndarray:
    """Pure-JAX reference of the same two-stage bilinear resize (unfused)."""
    n, c, h, w = image.shape
    wh1 = _bilinear_matrix(size, h)
    ww1 = _bilinear_matrix(size, w)
    wh2 = _bilinear_matrix(64, size)
    ww2 = _bilinear_matrix(64, size)
    x = image.astype(jnp.float32)
    t = jnp.einsum("oh,nchw->ncow", wh1, x)
    t = jnp.einsum("pw,ncow->ncop", ww1, t)
    u = jnp.einsum("qo,ncop->ncqp", wh2, t)
    u = jnp.einsum("rp,ncqp->ncqr", ww2, u)
    return u.astype(image.dtype)


if __name__ == "__main__":
    key = jax.random.PRNGKey(0)
    # small but shape-consistent with the module: 64x64 images, resize size=32
    batch, channels, hw = 2, 3, 64
    size = 32
    image = jax.random.uniform(key, (batch, channels, hw, hw), dtype=jnp.float32)

    out = rs_forward(image, size)
    out = jax.block_until_ready(out)

    ref = _rs_reference(image, size)
    assert out.shape == (batch, channels, 64, 64), out.shape
    assert jnp.allclose(out, ref, atol=1e-4, rtol=1e-4), "mismatch vs reference"

    print("KERNEL_OK")
</pallas_src>

<mosaic_0001>
module attributes {stable_mosaic.version = 11 : i64} {
  func.func @_rs_kernel(%arg0: i32, %arg1: memref<64x64xf32, #tpu.memory_space<vmem>>, %arg2: memref<64x64xf32, #tpu.memory_space<vmem>>, %arg3: memref<8x64x64xf32, #tpu.memory_space<vmem>>, %arg4: memref<8x64x64xf32, #tpu.memory_space<vmem>>) attributes {dimension_semantics = [#tpu.dimension_semantics<parallel>], iteration_bounds = array<i64: 1>, scalar_prefetch = 0 : i64, scratch_operands = 0 : i64, tpu.core_type = #tpu.core_type<tc>, window_params = [{pipeline_mode = #tpu.pipeline_mode<synchronous>, transform_indices = @transform_0, window_bounds = array<i64: 64, 64>}, {pipeline_mode = #tpu.pipeline_mode<synchronous>, transform_indices = @transform_1, window_bounds = array<i64: 64, 64>}, {transform_indices = @transform_2, window_bounds = array<i64: 8, 64, 64>}, {transform_indices = @transform_3, window_bounds = array<i64: 8, 64, 64>}]} {
    %c0 = arith.constant 0 : index
    %c0_0 = arith.constant 0 : index
    %c0_1 = arith.constant 0 : index
    %0 = vector.load %arg3[%c0, %c0_0, %c0_1] : memref<8x64x64xf32, #tpu.memory_space<vmem>>, vector<8x64x64xf32>
    %1 = vector.shape_cast %0 : vector<8x64x64xf32> to vector<512x64xf32>
    %c0_2 = arith.constant 0 : index
    %c0_3 = arith.constant 0 : index
    %2 = vector.load %arg2[%c0_2, %c0_3] : memref<64x64xf32, #tpu.memory_space<vmem>>, vector<64x64xf32>
    %cst = arith.constant dense<0.000000e+00> : vector<512x64xf32>
    %3 = tpu.matmul %1, %2, %cst {dimension_numbers = #tpu.dot_dimension_numbers<[1], [0], [0], [1], [0, 0, 1, 1], [], []>} : vector<512x64xf32>, vector<64x64xf32>, vector<512x64xf32> -> vector<512x64xf32>
    %4 = vector.shape_cast %3 : vector<512x64xf32> to vector<8x64x64xf32>
    %c0_4 = arith.constant 0 : index
    %c0_5 = arith.constant 0 : index
    %5 = vector.load %arg1[%c0_4, %c0_5] : memref<64x64xf32, #tpu.memory_space<vmem>>, vector<64x64xf32>
    %6 = vector.shape_cast %5 : vector<64x64xf32> to vector<1x64x64xf32>
    %7 = vector.shape_cast %6 : vector<1x64x64xf32> to vector<1x64x64xf32>
    %8 = vector.broadcast %7 : vector<1x64x64xf32> to vector<8x64x64xf32>
    "tpu.trace_start"() <{level = 10 : i32, message = "boh,bhd->bod"}> : () -> ()
    %cst_6 = arith.constant dense<0.000000e+00> : vector<8x64x64xf32>
    %9 = tpu.matmul %8, %4, %cst_6 {dimension_numbers = #tpu.dot_dimension_numbers<[2], [1], [1], [2], [0, 0, 0, 1, 1, 2], [0], [0]>} : vector<8x64x64xf32>, vector<8x64x64xf32>, vector<8x64x64xf32> -> vector<8x64x64xf32>
    "tpu.trace_stop"() : () -> ()
    %c0_7 = arith.constant 0 : index
    %c0_8 = arith.constant 0 : index
    %c0_9 = arith.constant 0 : index
    %10 = vector.load %arg4[%c0_7, %c0_8, %c0_9] : memref<8x64x64xf32, #tpu.memory_space<vmem>>, vector<8x64x64xf32>
    tpu.vector_store %arg4[%c0_7, %c0_8, %c0_9], %9 {strides = array<i32>} : memref<8x64x64xf32, #tpu.memory_space<vmem>>, vector<8x64x64xf32>,
    return
  }
  func.func @transform_0(%arg0: i32) -> (i32, i32) {
    %c0_i32 = arith.constant 0 : i32
    %c0_i32_0 = arith.constant 0 : i32
    %c0_i32_1 = arith.constant 0 : i32
    return %c0_i32, %c0_i32_0 : i32, i32
  }
  func.func @transform_1(%arg0: i32) -> (i32, i32) {
    %c0_i32 = arith.constant 0 : i32
    %c0_i32_0 = arith.constant 0 : i32
    %c0_i32_1 = arith.constant 0 : i32
    return %c0_i32, %c0_i32_0 : i32, i32
  }
  func.func @transform_2(%arg0: i32) -> (i32, i32, i32) {
    %c0_i32 = arith.constant 0 : i32
    %c0_i32_0 = arith.constant 0 : i32
    %c0_i32_1 = arith.constant 0 : i32
    return %arg0, %c0_i32, %c0_i32_0 : i32, i32, i32
  }
  func.func @transform_3(%arg0: i32) -> (i32, i32, i32) {
    %c0_i32 = arith.constant 0 : i32
    %c0_i32_0 = arith.constant 0 : i32
    %c0_i32_1 = arith.constant 0 : i32
    return %arg0, %c0_i32, %c0_i32_0 : i32, i32, i32
  }
}

</mosaic_0001>

<llo_original>
// kernel: rs_forward.1
$region0: #{rs_forward.1}
  #allocation0 [shape = 'u32[]', space=smem, size = 0x4, offset = 0x4, fixed_abs, tag = 'smem constant byte address 0x4 - core index']
  #allocation1 [shape = 'u32[144,128]{1,0:T(1,128)}', space=vmem, size = 0x12000, scoped, tag = 'internal scratch']
  %s0 = inlined_call_operand.vmem [shape: f32[64,64], index: 0, kind: input, shape index: {}]
  %s1 = inlined_call_operand.vmem [shape: f32[64,64], index: 1, kind: input, shape index: {}]
  %s2 = inlined_call_operand.vmem [shape: f32[8,64,64], index: 2, kind: input, shape index: {}]
  %s3 = inlined_call_operand.vmem [shape: f32[8,64,64], index: 3, kind: output, shape index: {}]
  %s4 = sld [smem:[#allocation0]]
  $region22: #{rs_forward.1} parent=0
    _
  %s6 = ssub.s32 1, %s4
  %s7 = scalar_select 0, %s6, %s4
  // Predicated region
  $region2: #{rs_forward.1} parent=0 // pred_check
    _
  $region3: #{rs_forward.1} parent=0 // pred_check_branch
    %9 = sbr.rel (0) target = $region5
  $region4: #{rs_forward.1} parent=0 // pred_region
    _
  $region5: #{rs_forward.1} parent=0 // pred_fallthru
    _
  // Predicated region
  $region6: #{rs_forward.1} parent=0 // pred_check
    _
  $region7: #{rs_forward.1} parent=0 // pred_check_branch
    %11 = sbr.rel (0) target = $region9
  $region8: #{rs_forward.1} parent=0 // pred_region
    _
  $region9: #{rs_forward.1} parent=0 // pred_fallthru
    _
  // Predicated region
  $region10: #{rs_forward.1} parent=0 // pred_check
    _
  $region11: #{rs_forward.1} parent=0 // pred_check_branch
    %13 = sbr.rel (0) target = $region13
  $region12: #{rs_forward.1} parent=0 // pred_region
    _
  $region13: #{rs_forward.1} parent=0 // pred_fallthru
    _
  %v14 = vld [vmem:[%s2] sm:$0xff]
  %v15 = vld [vmem:[%s2 + $0x8] sm:$0xff]
  %v16 = vld [vmem:[%s2 + $0x10] sm:$0xff]
  %v17 = vld [vmem:[%s2 + $0x18] sm:$0xff]
  %v18 = vld [vmem:[%s2 + $0x20] sm:$0xff]
  %v19 = vld [vmem:[%s2 + $0x28] sm:$0xff]
  %v20 = vld [vmem:[%s2 + $0x30] sm:$0xff]
  %v21 = vld [vmem:[%s2 + $0x38] sm:$0xff]
  %v22 = vld [vmem:[%s2 + $0x40] sm:$0xff]
  %v23 = vld [vmem:[%s2 + $0x48] sm:$0xff]
  %v24 = vld [vmem:[%s2 + $0x50] sm:$0xff]
  %v25 = vld [vmem:[%s2 + $0x58] sm:$0xff]
  %v26 = vld [vmem:[%s2 + $0x60] sm:$0xff]
  %v27 = vld [vmem:[%s2 + $0x68] sm:$0xff]
  %v28 = vld [vmem:[%s2 + $0x70] sm:$0xff]
  %v29 = vld [vmem:[%s2 + $0x78] sm:$0xff]
  %v30 = vld [vmem:[%s2 + $0x80] sm:$0xff]
  %v31 = vld [vmem:[%s2 + $0x88] sm:$0xff]
  %v32 = vld [vmem:[%s2 + $0x90] sm:$0xff]
  %v33 = vld [vmem:[%s2 + $0x98] sm:$0xff]
  %v34 = vld [vmem:[%s2 + $0xa0] sm:$0xff]
  %v35 = vld [vmem:[%s2 + $0xa8] sm:$0xff]
  %v36 = vld [vmem:[%s2 + $0xb0] sm:$0xff]
  %v37 = vld [vmem:[%s2 + $0xb8] sm:$0xff]
  %v38 = vld [vmem:[%s2 + $0xc0] sm:$0xff]
  %v39 = vld [vmem:[%s2 + $0xc8] sm:$0xff]
  %v40 = vld [vmem:[%s2 + $0xd0] sm:$0xff]
  %v41 = vld [vmem:[%s2 + $0xd8] sm:$0xff]
  %v42 = vld [vmem:[%s2 + $0xe0] sm:$0xff]
  %v43 = vld [vmem:[%s2 + $0xe8] sm:$0xff]
  %v44 = vld [vmem:[%s2 + $0xf0] sm:$0xff]
  %v45 = vld [vmem:[%s2 + $0xf8] sm:$0xff]
  %v46 = vld [vmem:[%s2 + $0x100] sm:$0xff]
  %v47 = vld [vmem:[%s2 + $0x108] sm:$0xff]
  %v48 = vld [vmem:[%s2 + $0x110] sm:$0xff]
  %v49 = vld [vmem:[%s2 + $0x118] sm:$0xff]
  %v50 = vld [vmem:[%s2 + $0x120] sm:$0xff]
  %v51 = vld [vmem:[%s2 + $0x128] sm:$0xff]
  %v52 = vld [vmem:[%s2 + $0x130] sm:$0xff]
  %v53 = vld [vmem:[%s2 + $0x138] sm:$0xff]
  %v54 = vld [vmem:[%s2 + $0x140] sm:$0xff]
  %v55 = vld [vmem:[%s2 + $0x148] sm:$0xff]
  %v56 = vld [vmem:[%s2 + $0x150] sm:$0xff]
  %v57 = vld [vmem:[%s2 + $0x158] sm:$0xff]
  %v58 = vld [vmem:[%s2 + $0x160] sm:$0xff]
  %v59 = vld [vmem:[%s2 + $0x168] sm:$0xff]
  %v60 = vld [vmem:[%s2 + $0x170] sm:$0xff]
  %v61 = vld [vmem:[%s2 + $0x178] sm:$0xff]
  %v62 = vld [vmem:[%s2 + $0x180] sm:$0xff]
  %v63 = vld [vmem:[%s2 + $0x188] sm:$0xff]
  %v64 = vld [vmem:[%s2 + $0x190] sm:$0xff]
  %v65 = vld [vmem:[%s2 + $0x198] sm:$0xff]
  %v66 = vld [vmem:[%s2 + $0x1a0] sm:$0xff]
  %v67 = vld [vmem:[%s2 + $0x1a8] sm:$0xff]
  %v68 = vld [vmem:[%s2 + $0x1b0] sm:$0xff]
  %v69 = vld [vmem:[%s2 + $0x1b8] sm:$0xff]
  %v70 = vld [vmem:[%s2 + $0x1c0] sm:$0xff]
  %v71 = vld [vmem:[%s2 + $0x1c8] sm:$0xff]
  %v72 = vld [vmem:[%s2 + $0x1d0] sm:$0xff]
  %v73 = vld [vmem:[%s2 + $0x1d8] sm:$0xff]
  %v74 = vld [vmem:[%s2 + $0x1e0] sm:$0xff]
  %v75 = vld [vmem:[%s2 + $0x1e8] sm:$0xff]
  %v76 = vld [vmem:[%s2 + $0x1f0] sm:$0xff]
  %v77 = vld [vmem:[%s2 + $0x1f8] sm:$0xff]
  %v78 = vld [vmem:[%s1] sm:$0xff]
  %v79 = vld [vmem:[%s1 + $0x8] sm:$0xff]
  %v80 = vld [vmem:[%s1 + $0x10] sm:$0xff]
  %v81 = vld [vmem:[%s1 + $0x18] sm:$0xff]
  %v82 = vld [vmem:[%s1 + $0x20] sm:$0xff]
  %v83 = vld [vmem:[%s1 + $0x28] sm:$0xff]
  %v84 = vld [vmem:[%s1 + $0x30] sm:$0xff]
  %v85 = vld [vmem:[%s1 + $0x38] sm:$0xff]
  %vm86 = vcmask 523264
  %v88 = vsel %vm86, %v14, 0
  %v91 = vsel %vm86, %v15, 0
  %v94 = vsel %vm86, %v16, 0
  %v97 = vsel %vm86, %v17, 0
  %v100 = vsel %vm86, %v18, 0
  %v103 = vsel %vm86, %v19, 0
  %v106 = vsel %vm86, %v20, 0
  %v109 = vsel %vm86, %v21, 0
  %v112 = vsel %vm86, %v22, 0
  %v115 = vsel %vm86, %v23, 0
  %v118 = vsel %vm86, %v24, 0
  %v121 = vsel %vm86, %v25, 0
  %v124 = vsel %vm86, %v26, 0
  %v127 = vsel %vm86, %v27, 0
  %v130 = vsel %vm86, %v28, 0
  %v133 = vsel %vm86, %v29, 0
  %v136 = vsel %vm86, %v30, 0
  %v139 = vsel %vm86, %v31, 0
  %v142 = vsel %vm86, %v32, 0
  %v145 = vsel %vm86, %v33, 0
  %v148 = vsel %vm86, %v34, 0
  %v151 = vsel %vm86, %v35, 0
  %v154 = vsel %vm86, %v36, 0
  %v157 = vsel %vm86, %v37, 0
  %v160 = vsel %vm86, %v38, 0
  %v163 = vsel %vm86, %v39, 0
  %v166 = vsel %vm86, %v40, 0
  %v169 = vsel %vm86, %v41, 0
  %v172 = vsel %vm86, %v42, 0
  %v175 = vsel %vm86, %v43, 0
  %v178 = vsel %vm86, %v44, 0
  %v181 = vsel %vm86, %v45, 0
  %v184 = vsel %vm86, %v46, 0
  %v187 = vsel %vm86, %v47, 0
  %v190 = vsel %vm86, %v48, 0
  %v193 = vsel %vm86, %v49, 0
  %v196 = vsel %vm86, %v50, 0
  %v199 = vsel %vm86, %v51, 0
  %v202 = vsel %vm86, %v52, 0
  %v205 = vsel %vm86, %v53, 0
  %v208 = vsel %vm86, %v54, 0
  %v211 = vsel %vm86, %v55, 0
  %v214 = vsel %vm86, %v56, 0
  %v217 = vsel %vm86, %v57, 0
  %v220 = vsel %vm86, %v58, 0
  %v223 = vsel %vm86, %v59, 0
  %v226 = vsel %vm86, %v60, 0
  %v229 = vsel %vm86, %v61, 0
  %v232 = vsel %vm86, %v62, 0
  %v235 = vsel %vm86, %v63, 0
  %v238 = vsel %vm86, %v64, 0
  %v241 = vsel %vm86, %v65, 0
  %v244 = vsel %vm86, %v66, 0
  %v247 = vsel %vm86, %v67, 0
  %v250 = vsel %vm86, %v68, 0
  %v253 = vsel %vm86, %v69, 0
  %v256 = vsel %vm86, %v70, 0
  %v259 = vsel %vm86, %v71, 0
  %v262 = vsel %vm86, %v72, 0
  %v265 = vsel %vm86, %v73, 0
  %v268 = vsel %vm86, %v74, 0
  %v271 = vsel %vm86, %v75, 0
  %v274 = vsel %vm86, %v76, 0
  %v277 = vsel %vm86, %v77, 0
  %279 = vmatprep.subr.mxu0 0.0
  %280 = vmatpush1.msra.mxu0 %v78
  %281 = vmatprep.subr.mxu0 0.0
  %282 = vmatpush1.msra.mxu0 %v79
  %283 = vmatprep.subr.mxu0 0.0
  %284 = vmatpush1.msra.mxu0 %v80
  %285 = vmatprep.subr.mxu0 0.0
  %286 = vmatpush1.msra.mxu0 %v81
  %287 = vmatprep.subr.mxu0 0.0
  %288 = vmatpush1.msra.mxu0 %v82
  %289 = vmatprep.subr.mxu0 0.0
  %290 = vmatpush1.msra.mxu0 %v83
  %291 = vmatprep.subr.mxu0 0.0
  %292 = vmatpush1.msra.mxu0 %v84
  %293 = vmatprep.subr.mxu0 0.0
  %294 = vmatpush1.msra.mxu0 %v85
  %295 = vmatprep.subr.mxu0 0.0
  %296 = vmatpush1.msra.mxu0 0.0
  %297 = vmatprep.subr.mxu0 0.0
  %298 = vmatpush1.msra.mxu0 0.0
  %299 = vmatprep.subr.mxu0 0.0
  %300 = vmatpush1.msra.mxu0 0.0
  %301 = vmatprep.subr.mxu0 0.0
  %302 = vmatpush1.msra.mxu0 0.0
  %303 = vmatprep.subr.mxu0 0.0
  %304 = vmatpush1.msra.mxu0 0.0
  %305 = vmatprep.subr.mxu0 0.0
  %306 = vmatpush1.msra.mxu0 0.0
  %307 = vmatprep.subr.mxu0 0.0
  %308 = vmatpush1.msra.mxu0 0.0
  %309 = vmatprep.subr.mxu0 0.0
  %310 = vmatpush1.msra.mxu0 0.0
  %311 = vmatprep.subr.mxu0 0.0
  %312 = vmatpush1.msra.mxu0 0.0
  %313 = vmatprep.subr.mxu0 0.0
  %314 = vmatpush1.msra.mxu0 0.0
  %315 = vmatprep.subr.mxu0 0.0
  %316 = vmatpush1.msra.mxu0 0.0
  %317 = vmatprep.subr.mxu0 0.0
  %318 = vmatpush1.msra.mxu0 0.0
  %319 = vmatprep.subr.mxu0 0.0
  %320 = vmatpush1.msra.mxu0 0.0
  %321 = vmatprep.subr.mxu0 0.0
  %322 = vmatpush1.msra.mxu0 0.0
  %323 = vmatprep.subr.mxu0 0.0
  %324 = vmatpush1.msra.mxu0 0.0
  %325 = vmatprep.subr.mxu0 0.0
  %326 = vmatpush1.msra.mxu0 0.0
  %327 = vmatprep.subr.mxu0 0.0
  %328 = vmatpush1.msra.mxu0 0.0
  %329 = vmatprep.subr.mxu0 0.0
  %330 = vmatpush1.msra.mxu0 0.0
  %331 = vmatprep.subr.mxu0 0.0
  %332 = vmatpush1.msra.mxu0 0.0
  %333 = vmatprep.subr.mxu0 0.0
  %334 = vmatpush1.msra.mxu0 0.0
  %335 = vmatprep.subr.mxu0 0.0
  %336 = vmatpush1.msra.mxu0 0.0
  %337 = vmatprep.subr.mxu0 0.0
  %338 = vmatpush1.msra.mxu0 0.0
  %339 = vmatprep.subr.mxu0 0.0
  %340 = vmatpush1.msra.mxu0 0.0
  %341 = vmatprep.subr.mxu0 0.0
  %342 = vmatpush1.msra.mxu0 0.0
  %343 = vmatprep.mubr.f32.mxu0 0.0
  %344 = vmatmul.mubr.f32.gmra.mrb[0].mxu0 %v88
  %v345 = vpop.f32.mrb[0].mxu0
  %v346 = vadd.f32 0.0, %v345
  %v347 = vpop.f32.mrb[0].mxu0
  %348 = vmatprep.mubr.f32.mxu0 0.0
  %349 = vmatmul.mubr.f32.gmra.mrb[0].mxu0 %v91
  %v350 = vpop.f32.mrb[0].mxu0
  %v351 = vadd.f32 0.0, %v350
  %v352 = vpop.f32.mrb[0].mxu0
  %353 = vmatprep.mubr.f32.mxu0 0.0
  %354 = vmatmul.mubr.f32.gmra.mrb[0].mxu0 %v94
  %v355 = vpop.f32.mrb[0].mxu0
  %v356 = vadd.f32 0.0, %v355
  %v357 = vpop.f32.mrb[0].mxu0
  %358 = vmatprep.mubr.f32.mxu0 0.0
  %359 = vmatmul.mubr.f32.gmra.mrb[0].mxu0 %v97
  %v360 = vpop.f32.mrb[0].mxu0
  %v361 = vadd.f32 0.0, %v360
  %v362 = vpop.f32.mrb[0].mxu0
  %363 = vmatprep.mubr.f32.mxu0 0.0
  %364 = vmatmul.mubr.f32.gmra.mrb[0].mxu0 %v100
  %v365 = vpop.f32.mrb[0].mxu0
  %v366 = vadd.f32 0.0, %v365
  %v367 = vpop.f32.mrb[0].mxu0
  %368 = vmatprep.mubr.f32.mxu0 0.0
  %369 = vmatmul.mubr.f32.gmra.mrb[0].mxu0 %v103
  %v370 = vpop.f32.mrb[0].mxu0
  %v371 = vadd.f32 0.0, %v370
  %v372 = vpop.f32.mrb[0].mxu0
  %373 = vmatprep.mubr.f32.mxu0 0.0
  %374 = vmatmul.mubr.f32.gmra.mrb[0].mxu0 %v106
  %v375 = vpop.f32.mrb[0].mxu0
  %v376 = vadd.f32 0.0, %v375
  %v377 = vpop.f32.mrb[0].mxu0
  %378 = vmatprep.mubr.f32.mxu0 0.0
  %379 = vmatmul.mubr.f32.gmra.mrb[0].mxu0 %v109
  %v380 = vpop.f32.mrb[0].mxu0
  %v381 = vadd.f32 0.0, %v380
  %v382 = vpop.f32.mrb[0].mxu0
  %383 = vmatprep.mubr.f32.mxu0 0.0
  %384 = vmatmul.mubr.f32.gmra.mrb[0].mxu0 %v112
  %v385 = vpop.f32.mrb[0].mxu0
  %v386 = vadd.f32 0.0, %v385
  %v387 = vpop.f32.mrb[0].mxu0
  %388 = vmatprep.mubr.f32.mxu0 0.0
  %389 = vmatmul.mubr.f32.gmra.mrb[0].mxu0 %v115
  %v390 = vpop.f32.mrb[0].mxu0
  %v391 = vadd.f32 0.0, %v390
  %v392 = vpop.f32.mrb[0].mxu0
  %393 = vmatprep.mubr.f32.mxu0 0.0
  %394 = vmatmul.mubr.f32.gmra.mrb[0].mxu0 %v118
  %v395 = vpop.f32.mrb[0].mxu0
  %v396 = vadd.f32 0.0, %v395
  %v397 = vpop.f32.mrb[0].mxu0
  %398 = vmatprep.mubr.f32.mxu0 0.0
  %399 = vmatmul.mubr.f32.gmra.mrb[0].mxu0 %v121
  %v400 = vpop.f32.mrb[0].mxu0
  %v401 = vadd.f32 0.0, %v400
  %v402 = vpop.f32.mrb[0].mxu0
  %403 = vmatprep.mubr.f32.mxu0 0.0
  %404 = vmatmul.mubr.f32.gmra.mrb[0].mxu0 %v124
  %v405 = vpop.f32.mrb[0].mxu0
  %v406 = vadd.f32 0.0, %v405
  %v407 = vpop.f32.mrb[0].mxu0
  %408 = vmatprep.mubr.f32.mxu0 0.0
  %409 = vmatmul.mubr.f32.gmra.mrb[0].mxu0 %v127
  %v410 = vpop.f32.mrb[0].mxu0
  %v411 = vadd.f32 0.0, %v410
  %v412 = vpop.f32.mrb[0].mxu0
  %413 = vmatprep.mubr.f32.mxu0 0.0
  %414 = vmatmul.mubr.f32.gmra.mrb[0].mxu0 %v130
  %v415 = vpop.f32.mrb[0].mxu0
  %v416 = vadd.f32 0.0, %v415
  %v417 = vpop.f32.mrb[0].mxu0
  %418 = vmatprep.mubr.f32.mxu0 0.0
  %419 = vmatmul.mubr.f32.gmra.mrb[0].mxu0 %v133
  %v420 = vpop.f32.mrb[0].mxu0
  %v421 = vadd.f32 0.0, %v420
  %v422 = vpop.f32.mrb[0].mxu0
  %423 = vmatprep.mubr.f32.mxu0 0.0
  %424 = vmatmul.mubr.f32.gmra.mrb[0].mxu0 %v136
  %v425 = vpop.f32.mrb[0].mxu0
  %v426 = vadd.f32 0.0, %v425
  %v427 = vpop.f32.mrb[0].mxu0
  %428 = vmatprep.mubr.f32.mxu0 0.0
  %429 = vmatmul.mubr.f32.gmra.mrb[0].mxu0 %v139
  %v430 = vpop.f32.mrb[0].mxu0
  %v431 = vadd.f32 0.0, %v430
  %v432 = vpop.f32.mrb[0].mxu0
  %433 = vmatprep.mubr.f32.mxu0 0.0
  %434 = vmatmul.mubr.f32.gmra.mrb[0].mxu0 %v142
  %v435 = vpop.f32.mrb[0].mxu0
  %v436 = vadd.f32 0.0, %v435
  %v437 = vpop.f32.mrb[0].mxu0
  %438 = vmatprep.mubr.f32.mxu0 0.0
  %439 = vmatmul.mubr.f32.gmra.mrb[0].mxu0 %v145
  %v440 = vpop.f32.mrb[0].mxu0
  %v441 = vadd.f32 0.0, %v440
  %v442 = vpop.f32.mrb[0].mxu0
  %443 = vmatprep.mubr.f32.mxu0 0.0
  %444 = vmatmul.mubr.f32.gmra.mrb[0].mxu0 %v148
  %v445 = vpop.f32.mrb[0].mxu0
  %v446 = vadd.f32 0.0, %v445
  %v447 = vpop.f32.mrb[0].mxu0
  %448 = vmatprep.mubr.f32.mxu0 0.0
  %449 = vmatmul.mubr.f32.gmra.mrb[0].mxu0 %v151
  %v450 = vpop.f32.mrb[0].mxu0
  %v451 = vadd.f32 0.0, %v450
  %v452 = vpop.f32.mrb[0].mxu0
  %453 = vmatprep.mubr.f32.mxu0 0.0
  %454 = vmatmul.mubr.f32.gmra.mrb[0].mxu0 %v154
  %v455 = vpop.f32.mrb[0].mxu0
  %v456 = vadd.f32 0.0, %v455
  %v457 = vpop.f32.mrb[0].mxu0
  %458 = vmatprep.mubr.f32.mxu0 0.0
  %459 = vmatmul.mubr.f32.gmra.mrb[0].mxu0 %v157
  %v460 = vpop.f32.mrb[0].mxu0
  %v461 = vadd.f32 0.0, %v460
  %v462 = vpop.f32.mrb[0].mxu0
  %463 = vmatprep.mubr.f32.mxu0 0.0
  %464 = vmatmul.mubr.f32.gmra.mrb[0].mxu0 %v160
  %v465 = vpop.f32.mrb[0].mxu0
  %v466 = vadd.f32 0.0, %v465
  %v467 = vpop.f32.mrb[0].mxu0
  %468 = vmatprep.mubr.f32.mxu0 0.0
  %469 = vmatmul.mubr.f32.gmra.mrb[0].mxu0 %v163
  %v470 = vpop.f32.mrb[0].mxu0
  %v471 = vadd.f32 0.0, %v470
  %v472 = vpop.f32.mrb[0].mxu0
  %473 = vmatprep.mubr.f32.mxu0 0.0
  %474 = vmatmul.mubr.f32.gmra.mrb[0].mxu0 %v166
  %v475 = vpop.f32.mrb[0].mxu0
  %v476 = vadd.f32 0.0, %v475
  %v477 = vpop.f32.mrb[0].mxu0
  %478 = vmatprep.mubr.f32.mxu0 0.0
  %479 = vmatmul.mubr.f32.gmra.mrb[0].mxu0 %v169
  %v480 = vpop.f32.mrb[0].mxu0
  %v481 = vadd.f32 0.0, %v480
  %v482 = vpop.f32.mrb[0].mxu0
  %483 = vmatprep.mubr.f32.mxu0 0.0
  %484 = vmatmul.mubr.f32.gmra.mrb[0].mxu0 %v172
  %v485 = vpop.f32.mrb[0].mxu0
  %v486 = vadd.f32 0.0, %v485
  %v487 = vpop.f32.mrb[0].mxu0
  %488 = vmatprep.mubr.f32.mxu0 0.0
  %489 = vmatmul.mubr.f32.gmra.mrb[0].mxu0 %v175
  %v490 = vpop.f32.mrb[0].mxu0
  %v491 = vadd.f32 0.0, %v490
  %v492 = vpop.f32.mrb[0].mxu0
  %493 = vmatprep.mubr.f32.mxu0 0.0
  %494 = vmatmul.mubr.f32.gmra.mrb[0].mxu0 %v178
  %v495 = vpop.f32.mrb[0].mxu0
  %v496 = vadd.f32 0.0, %v495
  %v497 = vpop.f32.mrb[0].mxu0
  %498 = vmatprep.mubr.f32.mxu0 0.0
  %499 = vmatmul.mubr.f32.gmra.mrb[0].mxu0 %v181
  %v500 = vpop.f32.mrb[0].mxu0
  %v501 = vadd.f32 0.0, %v500
  %v502 = vpop.f32.mrb[0].mxu0
  %503 = vmatprep.mubr.f32.mxu0 0.0
  %504 = vmatmul.mubr.f32.gmra.mrb[0].mxu0 %v184
  %v505 = vpop.f32.mrb[0].mxu0
  %v506 = vadd.f32 0.0, %v505
  %v507 = vpop.f32.mrb[0].mxu0
  %508 = vmatprep.mubr.f32.mxu0 0.0
  %509 = vmatmul.mubr.f32.gmra.mrb[0].mxu0 %v187
  %v510 = vpop.f32.mrb[0].mxu0
  %v511 = vadd.f32 0.0, %v510
  %v512 = vpop.f32.mrb[0].mxu0
  %513 = vmatprep.mubr.f32.mxu0 0.0
  %514 = vmatmul.mubr.f32.gmra.mrb[0].mxu0 %v190
  %v515 = vpop.f32.mrb[0].mxu0
  %v516 = vadd.f32 0.0, %v515
  %v517 = vpop.f32.mrb[0].mxu0
  %518 = vmatprep.mubr.f32.mxu0 0.0
  %519 = vmatmul.mubr.f32.gmra.mrb[0].mxu0 %v193
  %v520 = vpop.f32.mrb[0].mxu0
  %v521 = vadd.f32 0.0, %v520
  %v522 = vpop.f32.mrb[0].mxu0
  %523 = vmatprep.mubr.f32.mxu0 0.0
  %524 = vmatmul.mubr.f32.gmra.mrb[0].mxu0 %v196
  %v525 = vpop.f32.mrb[0].mxu0
  %v526 = vadd.f32 0.0, %v525
  %v527 = vpop.f32.mrb[0].mxu0
  %528 = vmatprep.mubr.f32.mxu0 0.0
  %529 = vmatmul.mubr.f32.gmra.mrb[0].mxu0 %v199
  %v530 = vpop.f32.mrb[0].mxu0
  %v531 = vadd.f32 0.0, %v530
  %v532 = vpop.f32.mrb[0].mxu0
  %533 = vmatprep.mubr.f32.mxu0 0.0
  %534 = vmatmul.mubr.f32.gmra.mrb[0].mxu0 %v202
  %v535 = vpop.f32.mrb[0].mxu0
  %v536 = vadd.f32 0.0, %v535
  %v537 = vpop.f32.mrb[0].mxu0
  %538 = vmatprep.mubr.f32.mxu0 0.0
  %539 = vmatmul.mubr.f32.gmra.mrb[0].mxu0 %v205
  %v540 = vpop.f32.mrb[0].mxu0
  %v541 = vadd.f32 0.0, %v540
  %v542 = vpop.f32.mrb[0].mxu0
  %543 = vmatprep.mubr.f32.mxu0 0.0
  %544 = vmatmul.mubr.f32.gmra.mrb[0].mxu0 %v208
  %v545 = vpop.f32.mrb[0].mxu0
  %v546 = vadd.f32 0.0, %v545
  %v547 = vpop.f32.mrb[0].mxu0
  %548 = vmatprep.mubr.f32.mxu0 0.0
  %549 = vmatmul.mubr.f32.gmra.mrb[0].mxu0 %v211
  %v550 = vpop.f32.mrb[0].mxu0
  %v551 = vadd.f32 0.0, %v550
  %v552 = vpop.f32.mrb[0].mxu0
  %553 = vmatprep.mubr.f32.mxu0 0.0
  %554 = vmatmul.mubr.f32.gmra.mrb[0].mxu0 %v214
  %v555 = vpop.f32.mrb[0].mxu0
  %v556 = vadd.f32 0.0, %v555
  %v557 = vpop.f32.mrb[0].mxu0
  %558 = vmatprep.mubr.f32.mxu0 0.0
  %559 = vmatmul.mubr.f32.gmra.mrb[0].mxu0 %v217
  %v560 = vpop.f32.mrb[0].mxu0
  %v561 = vadd.f32 0.0, %v560
  %v562 = vpop.f32.mrb[0].mxu0
  %563 = vmatprep.mubr.f32.mxu0 0.0
  %564 = vmatmul.mubr.f32.gmra.mrb[0].mxu0 %v220
  %v565 = vpop.f32.mrb[0].mxu0
  %v566 = vadd.f32 0.0, %v565
  %v567 = vpop.f32.mrb[0].mxu0
  %568 = vmatprep.mubr.f32.mxu0 0.0
  %569 = vmatmul.mubr.f32.gmra.mrb[0].mxu0 %v223
  %v570 = vpop.f32.mrb[0].mxu0
  %v571 = vadd.f32 0.0, %v570
  %v572 = vpop.f32.mrb[0].mxu0
  %573 = vmatprep.mubr.f32.mxu0 0.0
  %574 = vmatmul.mubr.f32.gmra.mrb[0].mxu0 %v226
  %v575 = vpop.f32.mrb[0].mxu0
  %v576 = vadd.f32 0.0, %v575
  %v577 = vpop.f32.mrb[0].mxu0
  %578 = vmatprep.mubr.f32.mxu0 0.0
  %579 = vmatmul.mubr.f32.gmra.mrb[0].mxu0 %v229
  %v580 = vpop.f32.mrb[0].mxu0
  %v581 = vadd.f32 0.0, %v580
  %v582 = vpop.f32.mrb[0].mxu0
  %583 = vmatprep.mubr.f32.mxu0 0.0
  %584 = vmatmul.mubr.f32.gmra.mrb[0].mxu0 %v232
  %v585 = vpop.f32.mrb[0].mxu0
  %v586 = vadd.f32 0.0, %v585
  %v587 = vpop.f32.mrb[0].mxu0
  %588 = vmatprep.mubr.f32.mxu0 0.0
  %589 = vmatmul.mubr.f32.gmra.mrb[0].mxu0 %v235
  %v590 = vpop.f32.mrb[0].mxu0
  %v591 = vadd.f32 0.0, %v590
  %v592 = vpop.f32.mrb[0].mxu0
  %593 = vmatprep.mubr.f32.mxu0 0.0
  %594 = vmatmul.mubr.f32.gmra.mrb[0].mxu0 %v238
  %v595 = vpop.f32.mrb[0].mxu0
  %v596 = vadd.f32 0.0, %v595
  %v597 = vpop.f32.mrb[0].mxu0
  %598 = vmatprep.mubr.f32.mxu0 0.0
  %599 = vmatmul.mubr.f32.gmra.mrb[0].mxu0 %v241
  %v600 = vpop.f32.mrb[0].mxu0
  %v601 = vadd.f32 0.0, %v600
  %v602 = vpop.f32.mrb[0].mxu0
  %603 = vmatprep.mubr.f32.mxu0 0.0
  %604 = vmatmul.mubr.f32.gmra.mrb[0].mxu0 %v244
  %v605 = vpop.f32.mrb[0].mxu0
  %v606 = vadd.f32 0.0, %v605
  %v607 = vpop.f32.mrb[0].mxu0
  %608 = vmatprep.mubr.f32.mxu0 0.0
  %609 = vmatmul.mubr.f32.gmra.mrb[0].mxu0 %v247
  %v610 = vpop.f32.mrb[0].mxu0
  %v611 = vadd.f32 0.0, %v610
  %v612 = vpop.f32.mrb[0].mxu0
  %613 = vmatprep.mubr.f32.mxu0 0.0
  %614 = vmatmul.mubr.f32.gmra.mrb[0].mxu0 %v250
  %v615 = vpop.f32.mrb[0].mxu0
  %v616 = vadd.f32 0.0, %v615
  %v617 = vpop.f32.mrb[0].mxu0
  %618 = vmatprep.mubr.f32.mxu0 0.0
  %619 = vmatmul.mubr.f32.gmra.mrb[0].mxu0 %v253
  %v620 = vpop.f32.mrb[0].mxu0
  %v621 = vadd.f32 0.0, %v620
  %v622 = vpop.f32.mrb[0].mxu0
  %623 = vmatprep.mubr.f32.mxu0 0.0
  %624 = vmatmul.mubr.f32.gmra.mrb[0].mxu0 %v256
  %v625 = vpop.f32.mrb[0].mxu0
  %v626 = vadd.f32 0.0, %v625
  %v627 = vpop.f32.mrb[0].mxu0
  %628 = vmatprep.mubr.f32.mxu0 0.0
  %629 = vmatmul.mubr.f32.gmra.mrb[0].mxu0 %v259
  %v630 = vpop.f32.mrb[0].mxu0
  %v631 = vadd.f32 0.0, %v630
  %v632 = vpop.f32.mrb[0].mxu0
  %633 = vmatprep.mubr.f32.mxu0 0.0
  %634 = vmatmul.mubr.f32.gmra.mrb[0].mxu0 %v262
  %v635 = vpop.f32.mrb[0].mxu0
  %v636 = vadd.f32 0.0, %v635
  %v637 = vpop.f32.mrb[0].mxu0
  %638 = vmatprep.mubr.f32.mxu0 0.0
  %639 = vmatmul.mubr.f32.gmra.mrb[0].mxu0 %v265
  %v640 = vpop.f32.mrb[0].mxu0
  %v641 = vadd.f32 0.0, %v640
  %v642 = vpop.f32.mrb[0].mxu0
  %643 = vmatprep.mubr.f32.mxu0 0.0
  %644 = vmatmul.mubr.f32.gmra.mrb[0].mxu0 %v268
  %v645 = vpop.f32.mrb[0].mxu0
  %v646 = vadd.f32 0.0, %v645
  %v647 = vpop.f32.mrb[0].mxu0
  %648 = vmatprep.mubr.f32.mxu0 0.0
  %649 = vmatmul.mubr.f32.gmra.mrb[0].mxu0 %v271
  %v650 = vpop.f32.mrb[0].mxu0
  %v651 = vadd.f32 0.0, %v650
  %v652 = vpop.f32.mrb[0].mxu0
  %653 = vmatprep.mubr.f32.mxu0 0.0
  %654 = vmatmul.mubr.f32.gmra.mrb[0].mxu0 %v274
  %v655 = vpop.f32.mrb[0].mxu0
  %v656 = vadd.f32 0.0, %v655
  %v657 = vpop.f32.mrb[0].mxu0
  %658 = vmatprep.mubr.f32.mxu0 0.0
  %659 = vmatmul.mubr.f32.gmra.mrb[0].mxu0 %v277
  %v660 = vpop.f32.mrb[0].mxu0
  %v661 = vadd.f32 0.0, %v660
  %v662 = vpop.f32.mrb[0].mxu0
  %663 = vdwg.mxu0
  %v664 = vld [vmem:[%s0] sm:$0xff]
  %v665 = vld [vmem:[%s0 + $0x8] sm:$0xff]
  %v666 = vld [vmem:[%s0 + $0x10] sm:$0xff]
  %v667 = vld [vmem:[%s0 + $0x18] sm:$0xff]
  %v668 = vld [vmem:[%s0 + $0x20] sm:$0xff]
  %v669 = vld [vmem:[%s0 + $0x28] sm:$0xff]
  %v670 = vld [vmem:[%s0 + $0x30] sm:$0xff]
  %v671 = vld [vmem:[%s0 + $0x38] sm:$0xff]
  %v673 = vsel %vm86, %v664, 0
  %v676 = vsel %vm86, %v665, 0
  %v679 = vsel %vm86, %v666, 0
  %v682 = vsel %vm86, %v667, 0
  %v685 = vsel %vm86, %v668, 0
  %v688 = vsel %vm86, %v669, 0
  %v691 = vsel %vm86, %v670, 0
  %v694 = vsel %vm86, %v671, 0
  %696 = vmatprep.subr.mxu0 0.0
  %697 = vmatpush1.msra.mxu0 %v346
  %698 = vmatprep.subr.mxu0 0.0
  %699 = vmatpush1.msra.mxu0 %v351
  %700 = vmatprep.subr.mxu0 0.0
  %701 = vmatpush1.msra.mxu0 %v356
  %702 = vmatprep.subr.mxu0 0.0
  %703 = vmatpush1.msra.mxu0 %v361
  %704 = vmatprep.subr.mxu0 0.0
  %705 = vmatpush1.msra.mxu0 %v366
  %706 = vmatprep.subr.mxu0 0.0
  %707 = vmatpush1.msra.mxu0 %v371
  %708 = vmatprep.subr.mxu0 0.0
  %709 = vmatpush1.msra.mxu0 %v376
  %710 = vmatprep.subr.mxu0 0.0
  %711 = vmatpush1.msra.mxu0 %v381
  %712 = vmatprep.subr.mxu0 0.0
  %713 = vmatpush1.msra.mxu0 0.0
  %714 = vmatprep.subr.mxu0 0.0
  %715 = vmatpush1.msra.mxu0 0.0
  %716 = vmatprep.subr.mxu0 0.0
  %717 = vmatpush1.msra.mxu0 0.0
  %718 = vmatprep.subr.mxu0 0.0
  %719 = vmatpush1.msra.mxu0 0.0
  %720 = vmatprep.subr.mxu0 0.0
  %721 = vmatpush1.msra.mxu0 0.0
  %722 = vmatprep.subr.mxu0 0.0
  %723 = vmatpush1.msra.mxu0 0.0
  %724 = vmatprep.subr.mxu0 0.0
  %725 = vmatpush1.msra.mxu0 0.0
  %726 = vmatprep.subr.mxu0 0.0
  %727 = vmatpush1.msra.mxu0 0.0
  %728 = vmatprep.subr.mxu0 0.0
  %729 = vmatpush1.msra.mxu0 0.0
  %730 = vmatprep.subr.mxu0 0.0
  %731 = vmatpush1.msra.mxu0 0.0
  %732 = vmatprep.subr.mxu0 0.0
  %733 = vmatpush1.msra.mxu0 0.0
  %734 = vmatprep.subr.mxu0 0.0
  %735 = vmatpush1.msra.mxu0 0.0
  %736 = vmatprep.subr.mxu0 0.0
  %737 = vmatpush1.msra.mxu0 0.0
  %738 = vmatprep.subr.mxu0 0.0
  %739 = vmatpush1.msra.mxu0 0.0
  %740 = vmatprep.subr.mxu0 0.0
  %741 = vmatpush1.msra.mxu0 0.0
  %742 = vmatprep.subr.mxu0 0.0
  %743 = vmatpush1.msra.mxu0 0.0
  %744 = vmatprep.subr.mxu0 0.0
  %745 = vmatpush1.msra.mxu0 0.0
  %746 = vmatprep.subr.mxu0 0.0
  %747 = vmatpush1.msra.mxu0 0.0
  %748 = vmatprep.subr.mxu0 0.0
  %749 = vmatpush1.msra.mxu0 0.0
  %750 = vmatprep.subr.mxu0 0.0
  %751 = vmatpush1.msra.mxu0 0.0
  %752 = vmatprep.subr.mxu0 0.0
  %753 = vmatpush1.msra.mxu0 0.0
  %754 = vmatprep.subr.mxu0 0.0
  %755 = vmatpush1.msra.mxu0 0.0
  %756 = vmatprep.subr.mxu0 0.0
  %757 = vmatpush1.msra.mxu0 0.0
  %758 = vmatprep.subr.mxu0 0.0
  %759 = vmatpush1.msra.mxu0 0.0
  %760 = vmatprep.mubr.f32.mxu0 0.0
  %761 = vmatmul.mubr.f32.gmra.mrb[0].mxu0 %v673
  %v762 = vpop.f32.mrb[0].mxu0
  %v763 = vadd.f32 0.0, %v762
  %v764 = vpop.f32.mrb[0].mxu0
  %765 = vmatprep.mubr.f32.mxu0 0.0
  %766 = vmatmul.mubr.f32.gmra.mrb[0].mxu0 %v676
  %v767 = vpop.f32.mrb[0].mxu0
  %v768 = vadd.f32 0.0, %v767
  %v769 = vpop.f32.mrb[0].mxu0
  %770 = vmatprep.mubr.f32.mxu0 0.0
  %771 = vmatmul.mubr.f32.gmra.mrb[0].mxu0 %v679
  %v772 = vpop.f32.mrb[0].mxu0
  %v773 = vadd.f32 0.0, %v772
  %v774 = vpop.f32.mrb[0].mxu0
  %775 = vmatprep.mubr.f32.mxu0 0.0
  %776 = vmatmul.mubr.f32.gmra.mrb[0].mxu0 %v682
  %v777 = vpop.f32.mrb[0].mxu0
  %v778 = vadd.f32 0.0, %v777
  %v779 = vpop.f32.mrb[0].mxu0
  %780 = vmatprep.mubr.f32.mxu0 0.0
  %781 = vmatmul.mubr.f32.gmra.mrb[0].mxu0 %v685
  %v782 = vpop.f32.mrb[0].mxu0
  %v783 = vadd.f32 0.0, %v782
  %v784 = vpop.f32.mrb[0].mxu0
  %785 = vmatprep.mubr.f32.mxu0 0.0
  %786 = vmatmul.mubr.f32.gmra.mrb[0].mxu0 %v688
  %v787 = vpop.f32.mrb[0].mxu0
  %v788 = vadd.f32 0.0, %v787
  %v789 = vpop.f32.mrb[0].mxu0
  %790 = vmatprep.mubr.f32.mxu0 0.0
  %791 = vmatmul.mubr.f32.gmra.mrb[0].mxu0 %v691
  %v792 = vpop.f32.mrb[0].mxu0
  %v793 = vadd.f32 0.0, %v792
  %v794 = vpop.f32.mrb[0].mxu0
  %795 = vmatprep.mubr.f32.mxu0 0.0
  %796 = vmatmul.mubr.f32.gmra.mrb[0].mxu0 %v694
  %v797 = vpop.f32.mrb[0].mxu0
  %v798 = vadd.f32 0.0, %v797
  %v799 = vpop.f32.mrb[0].mxu0
  %800 = vdwg.mxu0
  %801 = vmatprep.subr.mxu0 0.0
  %802 = vmatpush1.msra.mxu0 %v386
  %803 = vmatprep.subr.mxu0 0.0
  %804 = vmatpush1.msra.mxu0 %v391
  %805 = vmatprep.subr.mxu0 0.0
  %806 = vmatpush1.msra.mxu0 %v396
  %807 = vmatprep.subr.mxu0 0.0
  %808 = vmatpush1.msra.mxu0 %v401
  %809 = vmatprep.subr.mxu0 0.0
  %810 = vmatpush1.msra.mxu0 %v406
  %811 = vmatprep.subr.mxu0 0.0
  %812 = vmatpush1.msra.mxu0 %v411
  %813 = vmatprep.subr.mxu0 0.0
  %814 = vmatpush1.msra.mxu0 %v416
  %815 = vmatprep.subr.mxu0 0.0
  %816 = vmatpush1.msra.mxu0 %v421
  %817 = vmatprep.subr.mxu0 0.0
  %818 = vmatpush1.msra.mxu0 0.0
  %819 = vmatprep.subr.mxu0 0.0
  %820 = vmatpush1.msra.mxu0 0.0
  %821 = vmatprep.subr.mxu0 0.0
  %822 = vmatpush1.msra.mxu0 0.0
  %823 = vmatprep.subr.mxu0 0.0
  %824 = vmatpush1.msra.mxu0 0.0
  %825 = vmatprep.subr.mxu0 0.0
  %826 = vmatpush1.msra.mxu0 0.0
  %827 = vmatprep.subr.mxu0 0.0
  %828 = vmatpush1.msra.mxu0 0.0
  %829 = vmatprep.subr.mxu0 0.0
  %830 = vmatpush1.msra.mxu0 0.0
  %831 = vmatprep.subr.mxu0 0.0
  %832 = vmatpush1.msra.mxu0 0.0
  %833 = vmatprep.subr.mxu0 0.0
  %834 = vmatpush1.msra.mxu0 0.0
  %835 = vmatprep.subr.mxu0 0.0
  %836 = vmatpush1.msra.mxu0 0.0
  %837 = vmatprep.subr.mxu0 0.0
  %838 = vmatpush1.msra.mxu0 0.0
  %839 = vmatprep.subr.mxu0 0.0
  %840 = vmatpush1.msra.mxu0 0.0
  %841 = vmatprep.subr.mxu0 0.0
  %842 = vmatpush1.msra.mxu0 0.0
  %843 = vmatprep.subr.mxu0 0.0
  %844 = vmatpush1.msra.mxu0 0.0
  %845 = vmatprep.subr.mxu0 0.0
  %846 = vmatpush1.msra.mxu0 0.0
  %847 = vmatprep.subr.mxu0 0.0
  %848 = vmatpush1.msra.mxu0 0.0
  %849 = vmatprep.subr.mxu0 0.0
  %850 = vmatpush1.msra.mxu0 0.0
  %851 = vmatprep.subr.mxu0 0.0
  %852 = vmatpush1.msra.mxu0 0.0
  %853 = vmatprep.subr.mxu0 0.0
  %854 = vmatpush1.msra.mxu0 0.0
  %855 = vmatprep.subr.mxu0 0.0
  %856 = vmatpush1.msra.mxu0 0.0
  %857 = vmatprep.subr.mxu0 0.0
  %858 = vmatpush1.msra.mxu0 0.0
  %859 = vmatprep.subr.mxu0 0.0
  %860 = vmatpush1.msra.mxu0 0.0
  %861 = vmatprep.subr.mxu0 0.0
  %862 = vmatpush1.msra.mxu0 0.0
  %863 = vmatprep.subr.mxu0 0.0
  %864 = vmatpush1.msra.mxu0 0.0
  %865 = vmatprep.mubr.f32.mxu0 0.0
  %866 = vmatmul.mubr.f32.gmra.mrb[0].mxu0 %v673
  %v867 = vpop.f32.mrb[0].mxu0
  %v868 = vadd.f32 0.0, %v867
  %v869 = vpop.f32.mrb[0].mxu0
  %870 = vmatprep.mubr.f32.mxu0 0.0
  %871 = vmatmul.mubr.f32.gmra.mrb[0].mxu0 %v676
  %v872 = vpop.f32.mrb[0].mxu0
  %v873 = vadd.f32 0.0, %v872
  %v874 = vpop.f32.mrb[0].mxu0
  %875 = vmatprep.mubr.f32.mxu0 0.0
  %876 = vmatmul.mubr.f32.gmra.mrb[0].mxu0 %v679
  %v877 = vpop.f32.mrb[0].mxu0
  %v878 = vadd.f32 0.0, %v877
  %v879 = vpop.f32.mrb[0].mxu0
  %880 = vmatprep.mubr.f32.mxu0 0.0
  %881 = vmatmul.mubr.f32.gmra.mrb[0].mxu0 %v682
  %v882 = vpop.f32.mrb[0].mxu0
  %v883 = vadd.f32 0.0, %v882
  %v884 = vpop.f32.mrb[0].mxu0
  %885 = vmatprep.mubr.f32.mxu0 0.0
  %886 = vmatmul.mubr.f32.gmra.mrb[0].mxu0 %v685
  %v887 = vpop.f32.mrb[0].mxu0
  %v888 = vadd.f32 0.0, %v887
  %v889 = vpop.f32.mrb[0].mxu0
  %890 = vmatprep.mubr.f32.mxu0 0.0
  %891 = vmatmul.mubr.f32.gmra.mrb[0].mxu0 %v688
  %v892 = vpop.f32.mrb[0].mxu0
  %v893 = vadd.f32 0.0, %v892
  %v894 = vpop.f32.mrb[0].mxu0
  %895 = vmatprep.mubr.f32.mxu0 0.0
  %896 = vmatmul.mubr.f32.gmra.mrb[0].mxu0 %v691
  %v897 = vpop.f32.mrb[0].mxu0
  %v898 = vadd.f32 0.0, %v897
  %v899 = vpop.f32.mrb[0].mxu0
  %900 = vmatprep.mubr.f32.mxu0 0.0
  %901 = vmatmul.mubr.f32.gmra.mrb[0].mxu0 %v694
  %v902 = vpop.f32.mrb[0].mxu0
  %v903 = vadd.f32 0.0, %v902
  %v904 = vpop.f32.mrb[0].mxu0
  %905 = vdwg.mxu0
  %906 = vmatprep.subr.mxu0 0.0
  %907 = vmatpush1.msra.mxu0 %v426
  %908 = vmatprep.subr.mxu0 0.0
  %909 = vmatpush1.msra.mxu0 %v431
  %910 = vmatprep.subr.mxu0 0.0
  %911 = vmatpush1.msra.mxu0 %v436
  %912 = vmatprep.subr.mxu0 0.0
  %913 = vmatpush1.msra.mxu0 %v441
  %914 = vmatprep.subr.mxu0 0.0
  %915 = vmatpush1.msra.mxu0 %v446
  %916 = vmatprep.subr.mxu0 0.0
  %917 = vmatpush1.msra.mxu0 %v451
  %918 = vmatprep.subr.mxu0 0.0
  %919 = vmatpush1.msra.mxu0 %v456
  %920 = vmatprep.subr.mxu0 0.0
  %921 = vmatpush1.msra.mxu0 %v461
  %922 = vmatprep.subr.mxu0 0.0
  %923 = vmatpush1.msra.mxu0 0.0
  %924 = vmatprep.subr.mxu0 0.0
  %925 = vmatpush1.msra.mxu0 0.0
  %926 = vmatprep.subr.mxu0 0.0
  %927 = vmatpush1.msra.mxu0 0.0
  %928 = vmatprep.subr.mxu0 0.0
  %929 = vmatpush1.msra.mxu0 0.0
  %930 = vmatprep.subr.mxu0 0.0
  %931 = vmatpush1.msra.mxu0 0.0
  %932 = vmatprep.subr.mxu0 0.0
  %933 = vmatpush1.msra.mxu0 0.0
  %934 = vmatprep.subr.mxu0 0.0
  %935 = vmatpush1.msra.mxu0 0.0
  %936 = vmatprep.subr.mxu0 0.0
  %937 = vmatpush1.msra.mxu0 0.0
  %938 = vmatprep.subr.mxu0 0.0
  %939 = vmatpush1.msra.mxu0 0.0
  %940 = vmatprep.subr.mxu0 0.0
  %941 = vmatpush1.msra.mxu0 0.0
  %942 = vmatprep.subr.mxu0 0.0
  %943 = vmatpush1.msra.mxu0 0.0
  %944 = vmatprep.subr.mxu0 0.0
  %945 = vmatpush1.msra.mxu0 0.0
  %946 = vmatprep.subr.mxu0 0.0
  %947 = vmatpush1.msra.mxu0 0.0
  %948 = vmatprep.subr.mxu0 0.0
  %949 = vmatpush1.msra.mxu0 0.0
  %950 = vmatprep.subr.mxu0 0.0
  %951 = vmatpush1.msra.mxu0 0.0
  %952 = vmatprep.subr.mxu0 0.0
  %953 = vmatpush1.msra.mxu0 0.0
  %954 = vmatprep.subr.mxu0 0.0
  %955 = vmatpush1.msra.mxu0 0.0
  %956 = vmatprep.subr.mxu0 0.0
  %957 = vmatpush1.msra.mxu0 0.0
  %958 = vmatprep.subr.mxu0 0.0
  %959 = vmatpush1.msra.mxu0 0.0
  %960 = vmatprep.subr.mxu0 0.0
  %961 = vmatpush1.msra.mxu0 0.0
  %962 = vmatprep.subr.mxu0 0.0
  %963 = vmatpush1.msra.mxu0 0.0
  %964 = vmatprep.subr.mxu0 0.0
  %965 = vmatpush1.msra.mxu0 0.0
  %966 = vmatprep.subr.mxu0 0.0
  %967 = vmatpush1.msra.mxu0 0.0
  %968 = vmatprep.subr.mxu0 0.0
  %969 = vmatpush1.msra.mxu0 0.0
  %970 = vmatprep.mubr.f32.mxu0 0.0
  %971 = vmatmul.mubr.f32.gmra.mrb[0].mxu0 %v673
  %v972 = vpop.f32.mrb[0].mxu0
  %v973 = vadd.f32 0.0, %v972
  %v974 = vpop.f32.mrb[0].mxu0
  %975 = vmatprep.mubr.f32.mxu0 0.0
  %976 = vmatmul.mubr.f32.gmra.mrb[0].mxu0 %v676
  %v977 = vpop.f32.mrb[0].mxu0
  %v978 = vadd.f32 0.0, %v977
  %v979 = vpop.f32.mrb[0].mxu0
  %980 = vmatprep.mubr.f32.mxu0 0.0
  %981 = vmatmul.mubr.f32.gmra.mrb[0].mxu0 %v679
  %v982 = vpop.f32.mrb[0].mxu0
  %v983 = vadd.f32 0.0, %v982
  %v984 = vpop.f32.mrb[0].mxu0
  %985 = vmatprep.mubr.f32.mxu0 0.0
  %986 = vmatmul.mubr.f32.gmra.mrb[0].mxu0 %v682
  %v987 = vpop.f32.mrb[0].mxu0
  %v988 = vadd.f32 0.0, %v987
  %v989 = vpop.f32.mrb[0].mxu0
  %990 = vmatprep.mubr.f32.mxu0 0.0
  %991 = vmatmul.mubr.f32.gmra.mrb[0].mxu0 %v685
  %v992 = vpop.f32.mrb[0].mxu0
  %v993 = vadd.f32 0.0, %v992
  %v994 = vpop.f32.mrb[0].mxu0
  %995 = vmatprep.mubr.f32.mxu0 0.0
  %996 = vmatmul.mubr.f32.gmra.mrb[0].mxu0 %v688
  %v997 = vpop.f32.mrb[0].mxu0
  %v998 = vadd.f32 0.0, %v997
  %v999 = vpop.f32.mrb[0].mxu0
  %1000 = vmatprep.mubr.f32.mxu0 0.0
  %1001 = vmatmul.mubr.f32.gmra.mrb[0].mxu0 %v691
  %v1002 = vpop.f32.mrb[0].mxu0
  %v1003 = vadd.f32 0.0, %v1002
  %v1004 = vpop.f32.mrb[0].mxu0
  %1005 = vmatprep.mubr.f32.mxu0 0.0
  %1006 = vmatmul.mubr.f32.gmra.mrb[0].mxu0 %v694
  %v1007 = vpop.f32.mrb[0].mxu0
  %v1008 = vadd.f32 0.0, %v1007
  %v1009 = vpop.f32.mrb[0].mxu0
  %1010 = vdwg.mxu0
  %1011 = vmatprep.subr.mxu0 0.0
  %1012 = vmatpush1.msra.mxu0 %v466
  %1013 = vmatprep.subr.mxu0 0.0
  %1014 = vmatpush1.msra.mxu0 %v471
  %1015 = vmatprep.subr.mxu0 0.0
  %1016 = vmatpush1.msra.mxu0 %v476
  %1017 = vmatprep.subr.mxu0 0.0
  %1018 = vmatpush1.msra.mxu0 %v481
  %1019 = vmatprep.subr.mxu0 0.0
  %1020 = vmatpush1.msra.mxu0 %v486
  %1021 = vmatprep.subr.mxu0 0.0
  %1022 = vmatpush1.msra.mxu0 %v491
  %1023 = vmatprep.subr.mxu0 0.0
  %1024 = vmatpush1.msra.mxu0 %v496
  %1025 = vmatprep.subr.mxu0 0.0
  %1026 = vmatpush1.msra.mxu0 %v501
  %1027 = vmatprep.subr.mxu0 0.0
  %1028 = vmatpush1.msra.mxu0 0.0
  %1029 = vmatprep.subr.mxu0 0.0
  %1030 = vmatpush1.msra.mxu0 0.0
  %1031 = vmatprep.subr.mxu0 0.0
  %1032 = vmatpush1.msra.mxu0 0.0
  %1033 = vmatprep.subr.mxu0 0.0
  %1034 = vmatpush1.msra.mxu0 0.0
  %1035 = vmatprep.subr.mxu0 0.0
  %1036 = vmatpush1.msra.mxu0 0.0
  %1037 = vmatprep.subr.mxu0 0.0
  %1038 = vmatpush1.msra.mxu0 0.0
  %1039 = vmatprep.subr.mxu0 0.0
  %1040 = vmatpush1.msra.mxu0 0.0
  %1041 = vmatprep.subr.mxu0 0.0
  %1042 = vmatpush1.msra.mxu0 0.0
  %1043 = vmatprep.subr.mxu0 0.0
  %1044 = vmatpush1.msra.mxu0 0.0
  %1045 = vmatprep.subr.mxu0 0.0
  %1046 = vmatpush1.msra.mxu0 0.0
  %1047 = vmatprep.subr.mxu0 0.0
  %1048 = vmatpush1.msra.mxu0 0.0
  %1049 = vmatprep.subr.mxu0 0.0
  %1050 = vmatpush1.msra.mxu0 0.0
  %1051 = vmatprep.subr.mxu0 0.0
  %1052 = vmatpush1.msra.mxu0 0.0
  %1053 = vmatprep.subr.mxu0 0.0
  %1054 = vmatpush1.msra.mxu0 0.0
  %1055 = vmatprep.subr.mxu0 0.0
  %1056 = vmatpush1.msra.mxu0 0.0
  %1057 = vmatprep.subr.mxu0 0.0
  %1058 = vmatpush1.msra.mxu0 0.0
  %1059 = vmatprep.subr.mxu0 0.0
  %1060 = vmatpush1.msra.mxu0 0.0
  %1061 = vmatprep.subr.mxu0 0.0
  %1062 = vmatpush1.msra.mxu0 0.0
  %1063 = vmatprep.subr.mxu0 0.0
  %1064 = vmatpush1.msra.mxu0 0.0
  %1065 = vmatprep.subr.mxu0 0.0
  %1066 = vmatpush1.msra.mxu0 0.0
  %1067 = vmatprep.subr.mxu0 0.0
  %1068 = vmatpush1.msra.mxu0 0.0
  %1069 = vmatprep.subr.mxu0 0.0
  %1070 = vmatpush1.msra.mxu0 0.0
  %1071 = vmatprep.subr.mxu0 0.0
  %1072 = vmatpush1.msra.mxu0 0.0
  %1073 = vmatprep.subr.mxu0 0.0
  %1074 = vmatpush1.msra.mxu0 0.0
  %1075 = vmatprep.mubr.f32.mxu0 0.0
  %1076 = vmatmul.mubr.f32.gmra.mrb[0].mxu0 %v673
  %v1077 = vpop.f32.mrb[0].mxu0
  %v1078 = vadd.f32 0.0, %v1077
  %v1079 = vpop.f32.mrb[0].mxu0
  %1080 = vmatprep.mubr.f32.mxu0 0.0
  %1081 = vmatmul.mubr.f32.gmra.mrb[0].mxu0 %v676
  %v1082 = vpop.f32.mrb[0].mxu0
  %v1083 = vadd.f32 0.0, %v1082
  %v1084 = vpop.f32.mrb[0].mxu0
  %1085 = vmatprep.mubr.f32.mxu0 0.0
  %1086 = vmatmul.mubr.f32.gmra.mrb[0].mxu0 %v679
  %v1087 = vpop.f32.mrb[0].mxu0
  %v1088 = vadd.f32 0.0, %v1087
  %v1089 = vpop.f32.mrb[0].mxu0
  %1090 = vmatprep.mubr.f32.mxu0 0.0
  %1091 = vmatmul.mubr.f32.gmra.mrb[0].mxu0 %v682
  %v1092 = vpop.f32.mrb[0].mxu0
  %v1093 = vadd.f32 0.0, %v1092
  %v1094 = vpop.f32.mrb[0].mxu0
  %1095 = vmatprep.mubr.f32.mxu0 0.0
  %1096 = vmatmul.mubr.f32.gmra.mrb[0].mxu0 %v685
  %v1097 = vpop.f32.mrb[0].mxu0
  %v1098 = vadd.f32 0.0, %v1097
  %v1099 = vpop.f32.mrb[0].mxu0
  %1100 = vmatprep.mubr.f32.mxu0 0.0
  %1101 = vmatmul.mubr.f32.gmra.mrb[0].mxu0 %v688
  %v1102 = vpop.f32.mrb[0].mxu0
  %v1103 = vadd.f32 0.0, %v1102
  %v1104 = vpop.f32.mrb[0].mxu0
  %1105 = vmatprep.mubr.f32.mxu0 0.0
  %1106 = vmatmul.mubr.f32.gmra.mrb[0].mxu0 %v691
  %v1107 = vpop.f32.mrb[0].mxu0
  %v1108 = vadd.f32 0.0, %v1107
  %v1109 = vpop.f32.mrb[0].mxu0
  %1110 = vmatprep.mubr.f32.mxu0 0.0
  %1111 = vmatmul.mubr.f32.gmra.mrb[0].mxu0 %v694
  %v1112 = vpop.f32.mrb[0].mxu0
  %v1113 = vadd.f32 0.0, %v1112
  %v1114 = vpop.f32.mrb[0].mxu0
  %1115 = vdwg.mxu0
  %1116 = vmatprep.subr.mxu0 0.0
  %1117 = vmatpush1.msra.mxu0 %v506
  %1118 = vmatprep.subr.mxu0 0.0
  %1119 = vmatpush1.msra.mxu0 %v511
  %1120 = vmatprep.subr.mxu0 0.0
  %1121 = vmatpush1.msra.mxu0 %v516
  %1122 = vmatprep.subr.mxu0 0.0
  %1123 = vmatpush1.msra.mxu0 %v521
  %1124 = vmatprep.subr.mxu0 0.0
  %1125 = vmatpush1.msra.mxu0 %v526
  %1126 = vmatprep.subr.mxu0 0.0
  %1127 = vmatpush1.msra.mxu0 %v531
  %1128 = vmatprep.subr.mxu0 0.0
  %1129 = vmatpush1.msra.mxu0 %v536
  %1130 = vmatprep.subr.mxu0 0.0
  %1131 = vmatpush1.msra.mxu0 %v541
  %1132 = vmatprep.subr.mxu0 0.0
  %1133 = vmatpush1.msra.mxu0 0.0
  %1134 = vmatprep.subr.mxu0 0.0
  %1135 = vmatpush1.msra.mxu0 0.0
  %1136 = vmatprep.subr.mxu0 0.0
  %1137 = vmatpush1.msra.mxu0 0.0
  %1138 = vmatprep.subr.mxu0 0.0
  %1139 = vmatpush1.msra.mxu0 0.0
  %1140 = vmatprep.subr.mxu0 0.0
  %1141 = vmatpush1.msra.mxu0 0.0
  %1142 = vmatprep.subr.mxu0 0.0
  %1143 = vmatpush1.msra.mxu0 0.0
  %1144 = vmatprep.subr.mxu0 0.0
  %1145 = vmatpush1.msra.mxu0 0.0
  %1146 = vmatprep.subr.mxu0 0.0
  %1147 = vmatpush1.msra.mxu0 0.0
  %1148 = vmatprep.subr.mxu0 0.0
  %1149 = vmatpush1.msra.mxu0 0.0
  %1150 = vmatprep.subr.mxu0 0.0
  %1151 = vmatpush1.msra.mxu0 0.0
  %1152 = vmatprep.subr.mxu0 0.0
  %1153 = vmatpush1.msra.mxu0 0.0
  %1154 = vmatprep.subr.mxu0 0.0
  %1155 = vmatpush1.msra.mxu0 0.0
  %1156 = vmatprep.subr.mxu0 0.0
  %1157 = vmatpush1.msra.mxu0 0.0
  %1158 = vmatprep.subr.mxu0 0.0
  %1159 = vmatpush1.msra.mxu0 0.0
  %1160 = vmatprep.subr.mxu0 0.0
  %1161 = vmatpush1.msra.mxu0 0.0
  %1162 = vmatprep.subr.mxu0 0.0
  %1163 = vmatpush1.msra.mxu0 0.0
  %1164 = vmatprep.subr.mxu0 0.0
  %1165 = vmatpush1.msra.mxu0 0.0
  %1166 = vmatprep.subr.mxu0 0.0
  %1167 = vmatpush1.msra.mxu0 0.0
  %1168 = vmatprep.subr.mxu0 0.0
  %1169 = vmatpush1.msra.mxu0 0.0
  %1170 = vmatprep.subr.mxu0 0.0
  %1171 = vmatpush1.msra.mxu0 0.0
  %1172 = vmatprep.subr.mxu0 0.0
  %1173 = vmatpush1.msra.mxu0 0.0
  %1174 = vmatprep.subr.mxu0 0.0
  %1175 = vmatpush1.msra.mxu0 0.0
  %1176 = vmatprep.subr.mxu0 0.0
  %1177 = vmatpush1.msra.mxu0 0.0
  %1178 = vmatprep.subr.mxu0 0.0
  %1179 = vmatpush1.msra.mxu0 0.0
  %1180 = vmatprep.mubr.f32.mxu0 0.0
  %1181 = vmatmul.mubr.f32.gmra.mrb[0].mxu0 %v673
  %v1182 = vpop.f32.mrb[0].mxu0
  %v1183 = vadd.f32 0.0, %v1182
  %v1184 = vpop.f32.mrb[0].mxu0
  %1185 = vmatprep.mubr.f32.mxu0 0.0
  %1186 = vmatmul.mubr.f32.gmra.mrb[0].mxu0 %v676
  %v1187 = vpop.f32.mrb[0].mxu0
  %v1188 = vadd.f32 0.0, %v1187
  %v1189 = vpop.f32.mrb[0].mxu0
  %1190 = vmatprep.mubr.f32.mxu0 0.0
  %1191 = vmatmul.mubr.f32.gmra.mrb[0].mxu0 %v679
  %v1192 = vpop.f32.mrb[0].mxu0
  %v1193 = vadd.f32 0.0, %v1192
  %v1194 = vpop.f32.mrb[0].mxu0
  %1195 = vmatprep.mubr.f32.mxu0 0.0
  %1196 = vmatmul.mubr.f32.gmra.mrb[0].mxu0 %v682
  %v1197 = vpop.f32.mrb[0].mxu0
  %v1198 = vadd.f32 0.0, %v1197
  %v1199 = vpop.f32.mrb[0].mxu0
  %1200 = vmatprep.mubr.f32.mxu0 0.0
  %1201 = vmatmul.mubr.f32.gmra.mrb[0].mxu0 %v685
  %v1202 = vpop.f32.mrb[0].mxu0
  %v1203 = vadd.f32 0.0, %v1202
  %v1204 = vpop.f32.mrb[0].mxu0
  %1205 = vmatprep.mubr.f32.mxu0 0.0
  %1206 = vmatmul.mubr.f32.gmra.mrb[0].mxu0 %v688
  %v1207 = vpop.f32.mrb[0].mxu0
  %v1208 = vadd.f32 0.0, %v1207
  %v1209 = vpop.f32.mrb[0].mxu0
  %1210 = vmatprep.mubr.f32.mxu0 0.0
  %1211 = vmatmul.mubr.f32.gmra.mrb[0].mxu0 %v691
  %v1212 = vpop.f32.mrb[0].mxu0
  %v1213 = vadd.f32 0.0, %v1212
  %v1214 = vpop.f32.mrb[0].mxu0
  %1215 = vmatprep.mubr.f32.mxu0 0.0
  %1216 = vmatmul.mubr.f32.gmra.mrb[0].mxu0 %v694
  %v1217 = vpop.f32.mrb[0].mxu0
  %v1218 = vadd.f32 0.0, %v1217
  %v1219 = vpop.f32.mrb[0].mxu0
  %1220 = vdwg.mxu0
  %1221 = vmatprep.subr.mxu0 0.0
  %1222 = vmatpush1.msra.mxu0 %v546
  %1223 = vmatprep.subr.mxu0 0.0
  %1224 = vmatpush1.msra.mxu0 %v551
  %1225 = vmatprep.subr.mxu0 0.0
  %1226 = vmatpush1.msra.mxu0 %v556
  %1227 = vmatprep.subr.mxu0 0.0
  %1228 = vmatpush1.msra.mxu0 %v561
  %1229 = vmatprep.subr.mxu0 0.0
  %1230 = vmatpush1.msra.mxu0 %v566
  %1231 = vmatprep.subr.mxu0 0.0
  %1232 = vmatpush1.msra.mxu0 %v571
  %1233 = vmatprep.subr.mxu0 0.0
  %1234 = vmatpush1.msra.mxu0 %v576
  %1235 = vmatprep.subr.mxu0 0.0
  %1236 = vmatpush1.msra.mxu0 %v581
  %1237 = vmatprep.subr.mxu0 0.0
  %1238 = vmatpush1.msra.mxu0 0.0
  %1239 = vmatprep.subr.mxu0 0.0
  %1240 = vmatpush1.msra.mxu0 0.0
  %1241 = vmatprep.subr.mxu0 0.0
  %1242 = vmatpush1.msra.mxu0 0.0
  %1243 = vmatprep.subr.mxu0 0.0
  %1244 = vmatpush1.msra.mxu0 0.0
  %1245 = vmatprep.subr.mxu0 0.0
  %1246 = vmatpush1.msra.mxu0 0.0
  %1247 = vmatprep.subr.mxu0 0.0
  %1248 = vmatpush1.msra.mxu0 0.0
  %1249 = vmatprep.subr.mxu0 0.0
  %1250 = vmatpush1.msra.mxu0 0.0
  %1251 = vmatprep.subr.mxu0 0.0
  %1252 = vmatpush1.msra.mxu0 0.0
  %1253 = vmatprep.subr.mxu0 0.0
  %1254 = vmatpush1.msra.mxu0 0.0
  %1255 = vmatprep.subr.mxu0 0.0
  %1256 = vmatpush1.msra.mxu0 0.0
  %1257 = vmatprep.subr.mxu0 0.0
  %1258 = vmatpush1.msra.mxu0 0.0
  %1259 = vmatprep.subr.mxu0 0.0
  %1260 = vmatpush1.msra.mxu0 0.0
  %1261 = vmatprep.subr.mxu0 0.0
  %1262 = vmatpush1.msra.mxu0 0.0
  %1263 = vmatprep.subr.mxu0 0.0
  %1264 = vmatpush1.msra.mxu0 0.0
  %1265 = vmatprep.subr.mxu0 0.0
  %1266 = vmatpush1.msra.mxu0 0.0
  %1267 = vmatprep.subr.mxu0 0.0
  %1268 = vmatpush1.msra.mxu0 0.0
  %1269 = vmatprep.subr.mxu0 0.0
  %1270 = vmatpush1.msra.mxu0 0.0
  %1271 = vmatprep.subr.mxu0 0.0
  %1272 = vmatpush1.msra.mxu0 0.0
  %1273 = vmatprep.subr.mxu0 0.0
  %1274 = vmatpush1.msra.mxu0 0.0
  %1275 = vmatprep.subr.mxu0 0.0
  %1276 = vmatpush1.msra.mxu0 0.0
  %1277 = vmatprep.subr.mxu0 0.0
  %1278 = vmatpush1.msra.mxu0 0.0
  %1279 = vmatprep.subr.mxu0 0.0
  %1280 = vmatpush1.msra.mxu0 0.0
  %1281 = vmatprep.subr.mxu0 0.0
  %1282 = vmatpush1.msra.mxu0 0.0
  %1283 = vmatprep.subr.mxu0 0.0
  %1284 = vmatpush1.msra.mxu0 0.0
  %1285 = vmatprep.mubr.f32.mxu0 0.0
  %1286 = vmatmul.mubr.f32.gmra.mrb[0].mxu0 %v673
  %v1287 = vpop.f32.mrb[0].mxu0
  %v1288 = vadd.f32 0.0, %v1287
  %v1289 = vpop.f32.mrb[0].mxu0
  %1290 = vmatprep.mubr.f32.mxu0 0.0
  %1291 = vmatmul.mubr.f32.gmra.mrb[0].mxu0 %v676
  %v1292 = vpop.f32.mrb[0].mxu0
  %v1293 = vadd.f32 0.0, %v1292
  %v1294 = vpop.f32.mrb[0].mxu0
  %1295 = vmatprep.mubr.f32.mxu0 0.0
  %1296 = vmatmul.mubr.f32.gmra.mrb[0].mxu0 %v679
  %v1297 = vpop.f32.mrb[0].mxu0
  %v1298 = vadd.f32 0.0, %v1297
  %v1299 = vpop.f32.mrb[0].mxu0
  %1300 = vmatprep.mubr.f32.mxu0 0.0
  %1301 = vmatmul.mubr.f32.gmra.mrb[0].mxu0 %v682
  %v1302 = vpop.f32.mrb[0].mxu0
  %v1303 = vadd.f32 0.0, %v1302
  %v1304 = vpop.f32.mrb[0].mxu0
  %1305 = vmatprep.mubr.f32.mxu0 0.0
  %1306 = vmatmul.mubr.f32.gmra.mrb[0].mxu0 %v685
  %v1307 = vpop.f32.mrb[0].mxu0
  %v1308 = vadd.f32 0.0, %v1307
  %v1309 = vpop.f32.mrb[0].mxu0
  %1310 = vmatprep.mubr.f32.mxu0 0.0
  %1311 = vmatmul.mubr.f32.gmra.mrb[0].mxu0 %v688
  %v1312 = vpop.f32.mrb[0].mxu0
  %v1313 = vadd.f32 0.0, %v1312
  %v1314 = vpop.f32.mrb[0].mxu0
  %1315 = vmatprep.mubr.f32.mxu0 0.0
  %1316 = vmatmul.mubr.f32.gmra.mrb[0].mxu0 %v691
  %v1317 = vpop.f32.mrb[0].mxu0
  %v1318 = vadd.f32 0.0, %v1317
  %v1319 = vpop.f32.mrb[0].mxu0
  %1320 = vmatprep.mubr.f32.mxu0 0.0
  %1321 = vmatmul.mubr.f32.gmra.mrb[0].mxu0 %v694
  %v1322 = vpop.f32.mrb[0].mxu0
  %v1323 = vadd.f32 0.0, %v1322
  %v1324 = vpop.f32.mrb[0].mxu0
  %1325 = vdwg.mxu0
  %1326 = vmatprep.subr.mxu0 0.0
  %1327 = vmatpush1.msra.mxu0 %v586
  %1328 = vmatprep.subr.mxu0 0.0
  %1329 = vmatpush1.msra.mxu0 %v591
  %1330 = vmatprep.subr.mxu0 0.0
  %1331 = vmatpush1.msra.mxu0 %v596
  %1332 = vmatprep.subr.mxu0 0.0
  %1333 = vmatpush1.msra.mxu0 %v601
  %1334 = vmatprep.subr.mxu0 0.0
  %1335 = vmatpush1.msra.mxu0 %v606
  %1336 = vmatprep.subr.mxu0 0.0
  %1337 = vmatpush1.msra.mxu0 %v611
  %1338 = vmatprep.subr.mxu0 0.0
  %1339 = vmatpush1.msra.mxu0 %v616
  %1340 = vmatprep.subr.mxu0 0.0
  %1341 = vmatpush1.msra.mxu0 %v621
  %1342 = vmatprep.subr.mxu0 0.0
  %1343 = vmatpush1.msra.mxu0 0.0
  %1344 = vmatprep.subr.mxu0 0.0
  %1345 = vmatpush1.msra.mxu0 0.0
  %1346 = vmatprep.subr.mxu0 0.0
  %1347 = vmatpush1.msra.mxu0 0.0
  %1348 = vmatprep.subr.mxu0 0.0
  %1349 = vmatpush1.msra.mxu0 0.0
  %1350 = vmatprep.subr.mxu0 0.0
  %1351 = vmatpush1.msra.mxu0 0.0
  %1352 = vmatprep.subr.mxu0 0.0
  %1353 = vmatpush1.msra.mxu0 0.0
  %1354 = vmatprep.subr.mxu0 0.0
  %1355 = vmatpush1.msra.mxu0 0.0
  %1356 = vmatprep.subr.mxu0 0.0
  %1357 = vmatpush1.msra.mxu0 0.0
  %1358 = vmatprep.subr.mxu0 0.0
  %1359 = vmatpush1.msra.mxu0 0.0
  %1360 = vmatprep.subr.mxu0 0.0
  %1361 = vmatpush1.msra.mxu0 0.0
  %1362 = vmatprep.subr.mxu0 0.0
  %1363 = vmatpush1.msra.mxu0 0.0
  %1364 = vmatprep.subr.mxu0 0.0
  %1365 = vmatpush1.msra.mxu0 0.0
  %1366 = vmatprep.subr.mxu0 0.0
  %1367 = vmatpush1.msra.mxu0 0.0
  %1368 = vmatprep.subr.mxu0 0.0
  %1369 = vmatpush1.msra.mxu0 0.0
  %1370 = vmatprep.subr.mxu0 0.0
  %1371 = vmatpush1.msra.mxu0 0.0
  %1372 = vmatprep.subr.mxu0 0.0
  %1373 = vmatpush1.msra.mxu0 0.0
  %1374 = vmatprep.subr.mxu0 0.0
  %1375 = vmatpush1.msra.mxu0 0.0
  %1376 = vmatprep.subr.mxu0 0.0
  %1377 = vmatpush1.msra.mxu0 0.0
  %1378 = vmatprep.subr.mxu0 0.0
  %1379 = vmatpush1.msra.mxu0 0.0
  %1380 = vmatprep.subr.mxu0 0.0
  %1381 = vmatpush1.msra.mxu0 0.0
  %1382 = vmatprep.subr.mxu0 0.0
  %1383 = vmatpush1.msra.mxu0 0.0
  %1384 = vmatprep.subr.mxu0 0.0
  %1385 = vmatpush1.msra.mxu0 0.0
  %1386 = vmatprep.subr.mxu0 0.0
  %1387 = vmatpush1.msra.mxu0 0.0
  %1388 = vmatprep.subr.mxu0 0.0
  %1389 = vmatpush1.msra.mxu0 0.0
  %1390 = vmatprep.mubr.f32.mxu0 0.0
  %1391 = vmatmul.mubr.f32.gmra.mrb[0].mxu0 %v673
  %v1392 = vpop.f32.mrb[0].mxu0
  %v1393 = vadd.f32 0.0, %v1392
  %v1394 = vpop.f32.mrb[0].mxu0
  %1395 = vmatprep.mubr.f32.mxu0 0.0
  %1396 = vmatmul.mubr.f32.gmra.mrb[0].mxu0 %v676
  %v1397 = vpop.f32.mrb[0].mxu0
  %v1398 = vadd.f32 0.0, %v1397
  %v1399 = vpop.f32.mrb[0].mxu0
  %1400 = vmatprep.mubr.f32.mxu0 0.0
  %1401 = vmatmul.mubr.f32.gmra.mrb[0].mxu0 %v679
  %v1402 = vpop.f32.mrb[0].mxu0
  %v1403 = vadd.f32 0.0, %v1402
  %v1404 = vpop.f32.mrb[0].mxu0
  %1405 = vmatprep.mubr.f32.mxu0 0.0
  %1406 = vmatmul.mubr.f32.gmra.mrb[0].mxu0 %v682
  %v1407 = vpop.f32.mrb[0].mxu0
  %v1408 = vadd.f32 0.0, %v1407
  %v1409 = vpop.f32.mrb[0].mxu0
  %1410 = vmatprep.mubr.f32.mxu0 0.0
  %1411 = vmatmul.mubr.f32.gmra.mrb[0].mxu0 %v685
  %v1412 = vpop.f32.mrb[0].mxu0
  %v1413 = vadd.f32 0.0, %v1412
  %v1414 = vpop.f32.mrb[0].mxu0
  %1415 = vmatprep.mubr.f32.mxu0 0.0
  %1416 = vmatmul.mubr.f32.gmra.mrb[0].mxu0 %v688
  %v1417 = vpop.f32.mrb[0].mxu0
  %v1418 = vadd.f32 0.0, %v1417
  %v1419 = vpop.f32.mrb[0].mxu0
  %1420 = vmatprep.mubr.f32.mxu0 0.0
  %1421 = vmatmul.mubr.f32.gmra.mrb[0].mxu0 %v691
  %v1422 = vpop.f32.mrb[0].mxu0
  %v1423 = vadd.f32 0.0, %v1422
  %v1424 = vpop.f32.mrb[0].mxu0
  %1425 = vmatprep.mubr.f32.mxu0 0.0
  %1426 = vmatmul.mubr.f32.gmra.mrb[0].mxu0 %v694
  %v1427 = vpop.f32.mrb[0].mxu0
  %v1428 = vadd.f32 0.0, %v1427
  %v1429 = vpop.f32.mrb[0].mxu0
  %1430 = vdwg.mxu0
  %1431 = vmatprep.subr.mxu0 0.0
  %1432 = vmatpush1.msra.mxu0 %v626
  %1433 = vmatprep.subr.mxu0 0.0
  %1434 = vmatpush1.msra.mxu0 %v631
  %1435 = vmatprep.subr.mxu0 0.0
  %1436 = vmatpush1.msra.mxu0 %v636
  %1437 = vmatprep.subr.mxu0 0.0
  %1438 = vmatpush1.msra.mxu0 %v641
  %1439 = vmatprep.subr.mxu0 0.0
  %1440 = vmatpush1.msra.mxu0 %v646
  %1441 = vmatprep.subr.mxu0 0.0
  %1442 = vmatpush1.msra.mxu0 %v651
  %1443 = vmatprep.subr.mxu0 0.0
  %1444 = vmatpush1.msra.mxu0 %v656
  %1445 = vmatprep.subr.mxu0 0.0
  %1446 = vmatpush1.msra.mxu0 %v661
  %1447 = vmatprep.subr.mxu0 0.0
  %1448 = vmatpush1.msra.mxu0 0.0
  %1449 = vmatprep.subr.mxu0 0.0
  %1450 = vmatpush1.msra.mxu0 0.0
  %1451 = vmatprep.subr.mxu0 0.0
  %1452 = vmatpush1.msra.mxu0 0.0
  %1453 = vmatprep.subr.mxu0 0.0
  %1454 = vmatpush1.msra.mxu0 0.0
  %1455 = vmatprep.subr.mxu0 0.0
  %1456 = vmatpush1.msra.mxu0 0.0
  %1457 = vmatprep.subr.mxu0 0.0
  %1458 = vmatpush1.msra.mxu0 0.0
  %1459 = vmatprep.subr.mxu0 0.0
  %1460 = vmatpush1.msra.mxu0 0.0
  %1461 = vmatprep.subr.mxu0 0.0
  %1462 = vmatpush1.msra.mxu0 0.0
  %1463 = vmatprep.subr.mxu0 0.0
  %1464 = vmatpush1.msra.mxu0 0.0
  %1465 = vmatprep.subr.mxu0 0.0
  %1466 = vmatpush1.msra.mxu0 0.0
  %1467 = vmatprep.subr.mxu0 0.0
  %1468 = vmatpush1.msra.mxu0 0.0
  %1469 = vmatprep.subr.mxu0 0.0
  %1470 = vmatpush1.msra.mxu0 0.0
  %1471 = vmatprep.subr.mxu0 0.0
  %1472 = vmatpush1.msra.mxu0 0.0
  %1473 = vmatprep.subr.mxu0 0.0
  %1474 = vmatpush1.msra.mxu0 0.0
  %1475 = vmatprep.subr.mxu0 0.0
  %1476 = vmatpush1.msra.mxu0 0.0
  %1477 = vmatprep.subr.mxu0 0.0
  %1478 = vmatpush1.msra.mxu0 0.0
  %1479 = vmatprep.subr.mxu0 0.0
  %1480 = vmatpush1.msra.mxu0 0.0
  %1481 = vmatprep.subr.mxu0 0.0
  %1482 = vmatpush1.msra.mxu0 0.0
  %1483 = vmatprep.subr.mxu0 0.0
  %1484 = vmatpush1.msra.mxu0 0.0
  %1485 = vmatprep.subr.mxu0 0.0
  %1486 = vmatpush1.msra.mxu0 0.0
  %1487 = vmatprep.subr.mxu0 0.0
  %1488 = vmatpush1.msra.mxu0 0.0
  %1489 = vmatprep.subr.mxu0 0.0
  %1490 = vmatpush1.msra.mxu0 0.0
  %1491 = vmatprep.subr.mxu0 0.0
  %1492 = vmatpush1.msra.mxu0 0.0
  %1493 = vmatprep.subr.mxu0 0.0
  %1494 = vmatpush1.msra.mxu0 0.0
  %1495 = vmatprep.mubr.f32.mxu0 0.0
  %1496 = vmatmul.mubr.f32.gmra.mrb[0].mxu0 %v673
  %v1497 = vpop.f32.mrb[0].mxu0
  %v1498 = vadd.f32 0.0, %v1497
  %v1499 = vpop.f32.mrb[0].mxu0
  %1500 = vmatprep.mubr.f32.mxu0 0.0
  %1501 = vmatmul.mubr.f32.gmra.mrb[0].mxu0 %v676
  %v1502 = vpop.f32.mrb[0].mxu0
  %v1503 = vadd.f32 0.0, %v1502
  %v1504 = vpop.f32.mrb[0].mxu0
  %1505 = vmatprep.mubr.f32.mxu0 0.0
  %1506 = vmatmul.mubr.f32.gmra.mrb[0].mxu0 %v679
  %v1507 = vpop.f32.mrb[0].mxu0
  %v1508 = vadd.f32 0.0, %v1507
  %v1509 = vpop.f32.mrb[0].mxu0
  %1510 = vmatprep.mubr.f32.mxu0 0.0
  %1511 = vmatmul.mubr.f32.gmra.mrb[0].mxu0 %v682
  %v1512 = vpop.f32.mrb[0].mxu0
  %v1513 = vadd.f32 0.0, %v1512
  %v1514 = vpop.f32.mrb[0].mxu0
  %1515 = vmatprep.mubr.f32.mxu0 0.0
  %1516 = vmatmul.mubr.f32.gmra.mrb[0].mxu0 %v685
  %v1517 = vpop.f32.mrb[0].mxu0
  %v1518 = vadd.f32 0.0, %v1517
  %v1519 = vpop.f32.mrb[0].mxu0
  %1520 = vmatprep.mubr.f32.mxu0 0.0
  %1521 = vmatmul.mubr.f32.gmra.mrb[0].mxu0 %v688
  %v1522 = vpop.f32.mrb[0].mxu0
  %v1523 = vadd.f32 0.0, %v1522
  %v1524 = vpop.f32.mrb[0].mxu0
  %1525 = vmatprep.mubr.f32.mxu0 0.0
  %1526 = vmatmul.mubr.f32.gmra.mrb[0].mxu0 %v691
  %v1527 = vpop.f32.mrb[0].mxu0
  %v1528 = vadd.f32 0.0, %v1527
  %v1529 = vpop.f32.mrb[0].mxu0
  %1530 = vmatprep.mubr.f32.mxu0 0.0
  %1531 = vmatmul.mubr.f32.gmra.mrb[0].mxu0 %v694
  %v1532 = vpop.f32.mrb[0].mxu0
  %v1533 = vadd.f32 0.0, %v1532
  %v1534 = vpop.f32.mrb[0].mxu0
  %1535 = vdwg.mxu0
  %1536 = vst.msk [vmem:[%s3] sm:$0xff] %vm86, %v763
  %1537 = vst.msk [vmem:[%s3 + $0x8] sm:$0xff] %vm86, %v768
  %1538 = vst.msk [vmem:[%s3 + $0x10] sm:$0xff] %vm86, %v773
  %1539 = vst.msk [vmem:[%s3 + $0x18] sm:$0xff] %vm86, %v778
  %1540 = vst.msk [vmem:[%s3 + $0x20] sm:$0xff] %vm86, %v783
  %1541 = vst.msk [vmem:[%s3 + $0x28] sm:$0xff] %vm86, %v788
  %1542 = vst.msk [vmem:[%s3 + $0x30] sm:$0xff] %vm86, %v793
  %1543 = vst.msk [vmem:[%s3 + $0x38] sm:$0xff] %vm86, %v798
  %1544 = vst.msk [vmem:[%s3 + $0x40] sm:$0xff] %vm86, %v868
  %1545 = vst.msk [vmem:[%s3 + $0x48] sm:$0xff] %vm86, %v873
  %1546 = vst.msk [vmem:[%s3 + $0x50] sm:$0xff] %vm86, %v878
  %1547 = vst.msk [vmem:[%s3 + $0x58] sm:$0xff] %vm86, %v883
  %1548 = vst.msk [vmem:[%s3 + $0x60] sm:$0xff] %vm86, %v888
  %1549 = vst.msk [vmem:[%s3 + $0x68] sm:$0xff] %vm86, %v893
  %1550 = vst.msk [vmem:[%s3 + $0x70] sm:$0xff] %vm86, %v898
  %1551 = vst.msk [vmem:[%s3 + $0x78] sm:$0xff] %vm86, %v903
  %1552 = vst.msk [vmem:[%s3 + $0x80] sm:$0xff] %vm86, %v973
  %1553 = vst.msk [vmem:[%s3 + $0x88] sm:$0xff] %vm86, %v978
  %1554 = vst.msk [vmem:[%s3 + $0x90] sm:$0xff] %vm86, %v983
  %1555 = vst.msk [vmem:[%s3 + $0x98] sm:$0xff] %vm86, %v988
  %1556 = vst.msk [vmem:[%s3 + $0xa0] sm:$0xff] %vm86, %v993
  %1557 = vst.msk [vmem:[%s3 + $0xa8] sm:$0xff] %vm86, %v998
  %1558 = vst.msk [vmem:[%s3 + $0xb0] sm:$0xff] %vm86, %v1003
  %1559 = vst.msk [vmem:[%s3 + $0xb8] sm:$0xff] %vm86, %v1008
  %1560 = vst.msk [vmem:[%s3 + $0xc0] sm:$0xff] %vm86, %v1078
  %1561 = vst.msk [vmem:[%s3 + $0xc8] sm:$0xff] %vm86, %v1083
  %1562 = vst.msk [vmem:[%s3 + $0xd0] sm:$0xff] %vm86, %v1088
  %1563 = vst.msk [vmem:[%s3 + $0xd8] sm:$0xff] %vm86, %v1093
  %1564 = vst.msk [vmem:[%s3 + $0xe0] sm:$0xff] %vm86, %v1098
  %1565 = vst.msk [vmem:[%s3 + $0xe8] sm:$0xff] %vm86, %v1103
  %1566 = vst.msk [vmem:[%s3 + $0xf0] sm:$0xff] %vm86, %v1108
  %1567 = vst.msk [vmem:[%s3 + $0xf8] sm:$0xff] %vm86, %v1113
  %1568 = vst.msk [vmem:[%s3 + $0x100] sm:$0xff] %vm86, %v1183
  %1569 = vst.msk [vmem:[%s3 + $0x108] sm:$0xff] %vm86, %v1188
  %1570 = vst.msk [vmem:[%s3 + $0x110] sm:$0xff] %vm86, %v1193
  %1571 = vst.msk [vmem:[%s3 + $0x118] sm:$0xff] %vm86, %v1198
  %1572 = vst.msk [vmem:[%s3 + $0x120] sm:$0xff] %vm86, %v1203
  %1573 = vst.msk [vmem:[%s3 + $0x128] sm:$0xff] %vm86, %v1208
  %1574 = vst.msk [vmem:[%s3 + $0x130] sm:$0xff] %vm86, %v1213
  %1575 = vst.msk [vmem:[%s3 + $0x138] sm:$0xff] %vm86, %v1218
  %1576 = vst.msk [vmem:[%s3 + $0x140] sm:$0xff] %vm86, %v1288
  %1577 = vst.msk [vmem:[%s3 + $0x148] sm:$0xff] %vm86, %v1293
  %1578 = vst.msk [vmem:[%s3 + $0x150] sm:$0xff] %vm86, %v1298
  %1579 = vst.msk [vmem:[%s3 + $0x158] sm:$0xff] %vm86, %v1303
  %1580 = vst.msk [vmem:[%s3 + $0x160] sm:$0xff] %vm86, %v1308
  %1581 = vst.msk [vmem:[%s3 + $0x168] sm:$0xff] %vm86, %v1313
  %1582 = vst.msk [vmem:[%s3 + $0x170] sm:$0xff] %vm86, %v1318
  %1583 = vst.msk [vmem:[%s3 + $0x178] sm:$0xff] %vm86, %v1323
  %1584 = vst.msk [vmem:[%s3 + $0x180] sm:$0xff] %vm86, %v1393
  %1585 = vst.msk [vmem:[%s3 + $0x188] sm:$0xff] %vm86, %v1398
  %1586 = vst.msk [vmem:[%s3 + $0x190] sm:$0xff] %vm86, %v1403
  %1587 = vst.msk [vmem:[%s3 + $0x198] sm:$0xff] %vm86, %v1408
  %1588 = vst.msk [vmem:[%s3 + $0x1a0] sm:$0xff] %vm86, %v1413
  %1589 = vst.msk [vmem:[%s3 + $0x1a8] sm:$0xff] %vm86, %v1418
  %1590 = vst.msk [vmem:[%s3 + $0x1b0] sm:$0xff] %vm86, %v1423
  %1591 = vst.msk [vmem:[%s3 + $0x1b8] sm:$0xff] %vm86, %v1428
  %1592 = vst.msk [vmem:[%s3 + $0x1c0] sm:$0xff] %vm86, %v1498
  %1593 = vst.msk [vmem:[%s3 + $0x1c8] sm:$0xff] %vm86, %v1503
  %1594 = vst.msk [vmem:[%s3 + $0x1d0] sm:$0xff] %vm86, %v1508
  %1595 = vst.msk [vmem:[%s3 + $0x1d8] sm:$0xff] %vm86, %v1513
  %1596 = vst.msk [vmem:[%s3 + $0x1e0] sm:$0xff] %vm86, %v1518
  %1597 = vst.msk [vmem:[%s3 + $0x1e8] sm:$0xff] %vm86, %v1523
  %1598 = vst.msk [vmem:[%s3 + $0x1f0] sm:$0xff] %vm86, %v1528
  %1599 = vst.msk [vmem:[%s3 + $0x1f8] sm:$0xff] %vm86, %v1533
  // Predicated region
  $region14: #{rs_forward.1} parent=0 // pred_check
    _
  $region15: #{rs_forward.1} parent=0 // pred_check_branch
    %1601 = sbr.rel (0) target = $region17
  $region16: #{rs_forward.1} parent=0 // pred_region
    _
  $region17: #{rs_forward.1} parent=0 // pred_fallthru
    _
  // Predicated region
  $region18: #{rs_forward.1} parent=0 // pred_check
    _
  $region19: #{rs_forward.1} parent=0 // pred_check_branch
    %1603 = sbr.rel (0) target = $region21
  $region20: #{rs_forward.1} parent=0 // pred_region
    _
  $region21: #{rs_forward.1} parent=0 // pred_fallthru
    _

</llo_original>
